<compile_context>
chip_gen: v6e
topology: v6e:2x2x1
jax: 0.10.0
libtpu: 0.0.40
codegen_flags: <defaults>
</compile_context>

<pallas_src>
import jax
import jax.numpy as jnp
from jax.experimental import pallas as pl
from jax.experimental.pallas import tpu as pltpu

# Small synthetic hyper-parameters (real XLNet-base: H=768, 12 layers, 12 heads).
VOCAB = 64
HIDDEN = 128                       # multiple of 128 -> lane-dense
N_HEADS = 4
HEAD_DIM = HIDDEN // N_HEADS       # 32
FF = 2 * HIDDEN                    # 256
N_LAYERS = 2
N_TYPES = 2
LN_EPS = 1e-12


# ----------------------------- Fused layer kernel -------------------------- #

def _layernorm(x, gamma, beta):
    mu = jnp.mean(x, axis=-1, keepdims=True)
    var = jnp.mean((x - mu) ** 2, axis=-1, keepdims=True)
    return (x - mu) * jax.lax.rsqrt(var + LN_EPS) * gamma + beta


def _encoder_kernel(h0_ref, maskb_ref,
                    wqkv_ref, bqkv_ref, wo_ref, bo_ref, ln1g_ref, ln1b_ref,
                    w1_ref, b1_ref, w2_ref, b2_ref, ln2g_ref, ln2b_ref,
                    feat_ref, h_scratch, ctx_scratch):
    """Grid = (batch_tile, layer).  One encoder layer per step; the hidden
    state of the current batch tile lives in VMEM scratch across layers."""
    layer = pl.program_id(1)

    @pl.when(layer == 0)
    def _():
        h_scratch[...] = h0_ref[...]

    h = h_scratch[...]                                     # (S, H) f32

    # ---- self-attention --------------------------------------------------
    qkv = jnp.dot(h.astype(jnp.bfloat16), wqkv_ref[...],
                  preferred_element_type=jnp.float32) + bqkv_ref[...]
    scale = 1.0 / (HEAD_DIM ** 0.5)
    q = (qkv[:, :HIDDEN] * scale).astype(jnp.bfloat16)     # fold 1/sqrt(D) into q
    k = qkv[:, HIDDEN:2 * HIDDEN].astype(jnp.bfloat16)
    v = qkv[:, 2 * HIDDEN:].astype(jnp.bfloat16)

    # One head-major relayout: (S, H) -> (NH, S, D), built from static lane
    # slices stacked along the (cheap) major axis.
    def head_major(t):
        return jnp.stack(
            [t[:, i * HEAD_DIM:(i + 1) * HEAD_DIM] for i in range(N_HEADS)],
            axis=0)

    qh = head_major(q)                                     # (NH, S, D) bf16
    kh = head_major(k)
    vh = head_major(v)

    # All heads at once: scores, single mask broadcast, single softmax chain.
    s = jnp.einsum("hqd,hkd->hqk", qh, kh,
                   preferred_element_type=jnp.float32)     # (NH, S, S) f32
    s = s + maskb_ref[...]                                 # (1, S) additive bias
    m = jnp.max(s, axis=-1, keepdims=True)
    p = jnp.exp(s - m)
    denom = jnp.sum(p, axis=-1, keepdims=True)
    p = p * pl.reciprocal(denom, approx=True)              # EUP, not VALU divide
    ctx = jnp.einsum("hqk,hkd->hqd", p.astype(jnp.bfloat16), vh,
                     preferred_element_type=jnp.float32)   # (NH, S, D) f32

    # Implicit head concat: write each head's context into its lane range,
    # then ONE K=128 output projection (instead of 4 K=32 matmuls).
    for i in range(N_HEADS):
        ctx_scratch[:, i * HEAD_DIM:(i + 1) * HEAD_DIM] = ctx[i]
    attn_out = jnp.dot(ctx_scratch[...].astype(jnp.bfloat16), wo_ref[...],
                       preferred_element_type=jnp.float32) + bo_ref[...]

    h1 = _layernorm(attn_out + h, ln1g_ref[...], ln1b_ref[...])

    # ---- feed-forward (GELU), post-LN ------------------------------------
    ff = jnp.dot(h1.astype(jnp.bfloat16), w1_ref[...],
                 preferred_element_type=jnp.float32) + b1_ref[...]
    # tanh-GELU goes through the EUP slot; numerics tradeoff vs exact erf GELU.
    ff = jax.nn.gelu(ff, approximate=True)
    ff = jnp.dot(ff.astype(jnp.bfloat16), w2_ref[...],
                 preferred_element_type=jnp.float32) + b2_ref[...]
    h2 = _layernorm(ff + h1, ln2g_ref[...], ln2b_ref[...])

    h_scratch[...] = h2

    # param.cls == 1 branch: CLS token (position 0) of this sequence tile.
    # Only written on the final layer (output block is constant over layers).
    @pl.when(layer == pl.num_programs(1) - 1)
    def _():
        feat_ref[...] = h2[0:1, :]


# ----------------------------- Encoder forward ----------------------------- #

def xlnet_encoder_forward(params, x_ids, mask=None, segment=None):
    """Mirrors XLNetEncoder.forward: returns last_hidden_state[:, 0, :]."""
    B, S = x_ids.shape
    if mask is None:
        mask = jnp.ones((B, S), jnp.float32)
    if segment is None:
        segment = jnp.zeros((B, S), jnp.int32)

    # Embedding lookup (gather) stays in plain JAX.
    h0 = params["word_emb"][x_ids] + params["seg_emb"][segment]      # (B, S, H)

    # TODO(synk): XLNet's relative positional two-stream attention (r, r_w_bias,
    # r_r_bias, seg_embed) and pretrained weights are simplified to standard
    # self-attention with deterministic synthetic initialization.
    mask_bias = ((1.0 - mask.astype(jnp.float32)) * -1e30).reshape(B, 1, S)

    def batch_block(shape):                    # per-batch-tile, layer-invariant
        return pl.BlockSpec((None,) + shape, lambda b, l: (b, 0, 0))

    def layer_block(shape):                    # stacked (L, *shape) parameter
        return pl.BlockSpec((None,) + shape, lambda b, l: (l, 0, 0))

    feat = pl.pallas_call(
        _encoder_kernel,
        out_shape=jax.ShapeDtypeStruct((B, 1, HIDDEN), jnp.float32),
        grid=(B, N_LAYERS),                    # batch tiles (parallel) x layers
        in_specs=[
            batch_block((S, HIDDEN)),          # h0 (embedded input), per tile
            batch_block((1, S)),               # additive key mask, per tile
            layer_block((HIDDEN, 3 * HIDDEN)), # wqkv (bf16)
            layer_block((1, 3 * HIDDEN)),      # bqkv
            layer_block((HIDDEN, HIDDEN)),     # wo   (bf16)
            layer_block((1, HIDDEN)),          # bo
            layer_block((1, HIDDEN)),          # ln1_g
            layer_block((1, HIDDEN)),          # ln1_b
            layer_block((HIDDEN, FF)),         # w1   (bf16)
            layer_block((1, FF)),              # b1
            layer_block((FF, HIDDEN)),         # w2   (bf16)
            layer_block((1, HIDDEN)),          # b2
            layer_block((1, HIDDEN)),          # ln2_g
            layer_block((1, HIDDEN)),          # ln2_b
        ],
        out_specs=pl.BlockSpec((None, 1, HIDDEN), lambda b, l: (b, 0, 0)),
        scratch_shapes=[
            pltpu.VMEM((S, HIDDEN), jnp.float32),   # running hidden state
            pltpu.VMEM((S, HIDDEN), jnp.float32),   # head-concat buffer
        ],
        compiler_params=pltpu.CompilerParams(
            # batch tiles are independent (2 TCs on v7x); layers are sequential
            dimension_semantics=("parallel", "arbitrary"),
            vmem_limit_bytes=32 * 1024 * 1024,      # explicit; tiny at this size
        ),
    )(h0, mask_bias,
      params["wqkv"], params["bqkv"], params["wo"], params["bo"],
      params["ln1_g"], params["ln1_b"],
      params["w1"], params["b1"], params["w2"], params["b2"],
      params["ln2_g"], params["ln2_b"])
    return feat.reshape(B, HIDDEN)


# ----------------------------- Parameter init ------------------------------ #

def init_params(key):
    def nrm(k, shape, dtype=jnp.float32):
        return (0.02 * jax.random.normal(k, shape, jnp.float32)).astype(dtype)

    keys = jax.random.split(key, 6)
    L = N_LAYERS
    return {
        "word_emb": nrm(keys[0], (VOCAB, HIDDEN)),
        "seg_emb": nrm(keys[1], (N_TYPES, HIDDEN)),
        # Per-layer parameters stacked along a leading layer axis.
        "wqkv": nrm(keys[2], (L, HIDDEN, 3 * HIDDEN), jnp.bfloat16),
        "bqkv": jnp.zeros((L, 1, 3 * HIDDEN), jnp.float32),
        "wo": nrm(keys[3], (L, HIDDEN, HIDDEN), jnp.bfloat16),
        "bo": jnp.zeros((L, 1, HIDDEN), jnp.float32),
        "ln1_g": jnp.ones((L, 1, HIDDEN), jnp.float32),
        "ln1_b": jnp.zeros((L, 1, HIDDEN), jnp.float32),
        "w1": nrm(keys[4], (L, HIDDEN, FF), jnp.bfloat16),
        "b1": jnp.zeros((L, 1, FF), jnp.float32),
        "w2": nrm(keys[5], (L, FF, HIDDEN), jnp.bfloat16),
        "b2": jnp.zeros((L, 1, HIDDEN), jnp.float32),
        "ln2_g": jnp.ones((L, 1, HIDDEN), jnp.float32),
        "ln2_b": jnp.zeros((L, 1, HIDDEN), jnp.float32),
    }


# ---------------------------------- Main ----------------------------------- #

if __name__ == "__main__":
    key = jax.random.PRNGKey(0)
    kp, kx = jax.random.split(key, 2)

    B, S = 2, 8
    params = init_params(kp)

    # Token ids (avoid special ids 0..3), full attention mask, all-zero segments.
    x = jax.random.randint(kx, (B, S), 4, VOCAB, dtype=jnp.int32)
    mask = jnp.ones((B, S), jnp.float32)
    segment = jnp.zeros((B, S), jnp.int32)

    forward = jax.jit(xlnet_encoder_forward)
    feat = jax.block_until_ready(forward(params, x, mask, segment))

    assert feat.shape == (B, HIDDEN) and feat.dtype == jnp.float32
    assert bool(jnp.all(jnp.isfinite(feat)))
    print("KERNEL_OK")
</pallas_src>

<mosaic_0001>
module attributes {stable_mosaic.version = 11 : i64} {
  func.func @_encoder_kernel(%arg0: i32, %arg1: i32, %arg2: memref<1x8x128xf32, #tpu.memory_space<vmem>>, %arg3: memref<1x1x8xf32, #tpu.memory_space<vmem>>, %arg4: memref<1x128x384xbf16, #tpu.memory_space<vmem>>, %arg5: memref<1x1x384xf32, #tpu.memory_space<vmem>>, %arg6: memref<1x128x128xbf16, #tpu.memory_space<vmem>>, %arg7: memref<1x1x128xf32, #tpu.memory_space<vmem>>, %arg8: memref<1x1x128xf32, #tpu.memory_space<vmem>>, %arg9: memref<1x1x128xf32, #tpu.memory_space<vmem>>, %arg10: memref<1x128x256xbf16, #tpu.memory_space<vmem>>, %arg11: memref<1x1x256xf32, #tpu.memory_space<vmem>>, %arg12: memref<1x256x128xbf16, #tpu.memory_space<vmem>>, %arg13: memref<1x1x128xf32, #tpu.memory_space<vmem>>, %arg14: memref<1x1x128xf32, #tpu.memory_space<vmem>>, %arg15: memref<1x1x128xf32, #tpu.memory_space<vmem>>, %arg16: memref<1x1x128xf32, #tpu.memory_space<vmem>>, %arg17: memref<8x128xf32, #tpu.memory_space<vmem>>, %arg18: memref<8x128xf32, #tpu.memory_space<vmem>>) attributes {dimension_semantics = [#tpu.dimension_semantics<parallel>, #tpu.dimension_semantics<arbitrary>], iteration_bounds = array<i64: 2, 2>, scalar_prefetch = 0 : i64, scratch_operands = 2 : i64, tpu.core_type = #tpu.core_type<tc>, window_params = [{transform_indices = @transform_0, window_bounds = array<i64: 1, 8, 128>}, {transform_indices = @transform_1, window_bounds = array<i64: 1, 1, 8>}, {transform_indices = @transform_2, window_bounds = array<i64: 1, 128, 384>}, {transform_indices = @transform_3, window_bounds = array<i64: 1, 1, 384>}, {transform_indices = @transform_4, window_bounds = array<i64: 1, 128, 128>}, {transform_indices = @transform_5, window_bounds = array<i64: 1, 1, 128>}, {transform_indices = @transform_6, window_bounds = array<i64: 1, 1, 128>}, {transform_indices = @transform_7, window_bounds = array<i64: 1, 1, 128>}, {transform_indices = @transform_8, window_bounds = array<i64: 1, 128, 256>}, {transform_indices = @transform_9, window_bounds = array<i64: 1, 1, 256>}, {transform_indices = @transform_10, window_bounds = array<i64: 1, 256, 128>}, {transform_indices = @transform_11, window_bounds = array<i64: 1, 1, 128>}, {transform_indices = @transform_12, window_bounds = array<i64: 1, 1, 128>}, {transform_indices = @transform_13, window_bounds = array<i64: 1, 1, 128>}, {transform_indices = @transform_14, window_bounds = array<i64: 1, 1, 128>}]} {
    %c0_i32 = arith.constant 0 : i32
    %0 = arith.cmpi eq, %arg1, %c0_i32 : i32
    %1 = arith.extui %0 : i1 to i32
    %c0_i32_0 = arith.constant 0 : i32
    %2 = arith.cmpi ne, %1, %c0_i32_0 : i32
    scf.if %2 {
      %c0_73 = arith.constant 0 : index
      %c0_74 = arith.constant 0 : index
      %c0_75 = arith.constant 0 : index
      %173 = vector.load %arg2[%c0_73, %c0_74, %c0_75] : memref<1x8x128xf32, #tpu.memory_space<vmem>>, vector<1x8x128xf32>
      %174 = vector.shape_cast %173 : vector<1x8x128xf32> to vector<8x128xf32>
      %c0_76 = arith.constant 0 : index
      %c0_77 = arith.constant 0 : index
      %175 = vector.load %arg17[%c0_76, %c0_77] : memref<8x128xf32, #tpu.memory_space<vmem>>, vector<8x128xf32>
      tpu.vector_store %arg17[%c0_76, %c0_77], %174 {strides = array<i32>} : memref<8x128xf32, #tpu.memory_space<vmem>>, vector<8x128xf32>,
    } else {
    }
    %c0 = arith.constant 0 : index
    %c0_1 = arith.constant 0 : index
    %3 = vector.load %arg17[%c0, %c0_1] : memref<8x128xf32, #tpu.memory_space<vmem>>, vector<8x128xf32>
    %4 = arith.truncf %3 : vector<8x128xf32> to vector<8x128xbf16>
    %c0_2 = arith.constant 0 : index
    %c0_3 = arith.constant 0 : index
    %c0_4 = arith.constant 0 : index
    %5 = vector.load %arg4[%c0_2, %c0_3, %c0_4] : memref<1x128x384xbf16, #tpu.memory_space<vmem>>, vector<1x128x384xbf16>
    %6 = vector.shape_cast %5 : vector<1x128x384xbf16> to vector<128x384xbf16>
    %cst = arith.constant dense<0.000000e+00> : vector<8x384xf32>
    %7 = tpu.matmul %4, %6, %cst {dimension_numbers = #tpu.dot_dimension_numbers<[1], [0], [0], [1], [0, 0, 1, 1], [], []>} : vector<8x128xbf16>, vector<128x384xbf16>, vector<8x384xf32> -> vector<8x384xf32>
    %c0_5 = arith.constant 0 : index
    %c0_6 = arith.constant 0 : index
    %c0_7 = arith.constant 0 : index
    %8 = vector.load %arg5[%c0_5, %c0_6, %c0_7] : memref<1x1x384xf32, #tpu.memory_space<vmem>>, vector<1x1x384xf32>
    %9 = vector.shape_cast %8 : vector<1x1x384xf32> to vector<1x384xf32>
    %10 = vector.broadcast %9 : vector<1x384xf32> to vector<8x384xf32>
    %11 = arith.addf %7, %10 : vector<8x384xf32>
    %12 = vector.extract_strided_slice %11 {offsets = [0, 0], sizes = [8, 128], strides = [1, 1]} : vector<8x384xf32> to vector<8x128xf32>
    %cst_8 = arith.constant 0.176776692 : f32
    %13 = vector.broadcast %cst_8 : f32 to vector<8x128xf32>
    %14 = arith.mulf %12, %13 : vector<8x128xf32>
    %15 = arith.truncf %14 : vector<8x128xf32> to vector<8x128xbf16>
    %16 = vector.extract_strided_slice %11 {offsets = [0, 128], sizes = [8, 128], strides = [1, 1]} : vector<8x384xf32> to vector<8x128xf32>
    %17 = arith.truncf %16 : vector<8x128xf32> to vector<8x128xbf16>
    %18 = vector.extract_strided_slice %11 {offsets = [0, 256], sizes = [8, 128], strides = [1, 1]} : vector<8x384xf32> to vector<8x128xf32>
    %19 = arith.truncf %18 : vector<8x128xf32> to vector<8x128xbf16>
    %20 = vector.extract_strided_slice %15 {offsets = [0, 0], sizes = [8, 32], strides = [1, 1]} : vector<8x128xbf16> to vector<8x32xbf16>
    %21 = vector.extract_strided_slice %15 {offsets = [0, 32], sizes = [8, 32], strides = [1, 1]} : vector<8x128xbf16> to vector<8x32xbf16>
    %22 = vector.extract_strided_slice %15 {offsets = [0, 64], sizes = [8, 32], strides = [1, 1]} : vector<8x128xbf16> to vector<8x32xbf16>
    %23 = vector.extract_strided_slice %15 {offsets = [0, 96], sizes = [8, 32], strides = [1, 1]} : vector<8x128xbf16> to vector<8x32xbf16>
    %24 = vector.shape_cast %20 : vector<8x32xbf16> to vector<1x8x32xbf16>
    %25 = vector.shape_cast %21 : vector<8x32xbf16> to vector<1x8x32xbf16>
    %26 = vector.shape_cast %22 : vector<8x32xbf16> to vector<1x8x32xbf16>
    %27 = vector.shape_cast %23 : vector<8x32xbf16> to vector<1x8x32xbf16>
    %28 = tpu.concatenate %24, %25, %26, %27 in 0 : vector<1x8x32xbf16>, vector<1x8x32xbf16>, vector<1x8x32xbf16>, vector<1x8x32xbf16> -> vector<4x8x32xbf16>
    %29 = vector.extract_strided_slice %17 {offsets = [0, 0], sizes = [8, 32], strides = [1, 1]} : vector<8x128xbf16> to vector<8x32xbf16>
    %30 = vector.extract_strided_slice %17 {offsets = [0, 32], sizes = [8, 32], strides = [1, 1]} : vector<8x128xbf16> to vector<8x32xbf16>
    %31 = vector.extract_strided_slice %17 {offsets = [0, 64], sizes = [8, 32], strides = [1, 1]} : vector<8x128xbf16> to vector<8x32xbf16>
    %32 = vector.extract_strided_slice %17 {offsets = [0, 96], sizes = [8, 32], strides = [1, 1]} : vector<8x128xbf16> to vector<8x32xbf16>
    %33 = vector.shape_cast %29 : vector<8x32xbf16> to vector<1x8x32xbf16>
    %34 = vector.shape_cast %30 : vector<8x32xbf16> to vector<1x8x32xbf16>
    %35 = vector.shape_cast %31 : vector<8x32xbf16> to vector<1x8x32xbf16>
    %36 = vector.shape_cast %32 : vector<8x32xbf16> to vector<1x8x32xbf16>
    %37 = tpu.concatenate %33, %34, %35, %36 in 0 : vector<1x8x32xbf16>, vector<1x8x32xbf16>, vector<1x8x32xbf16>, vector<1x8x32xbf16> -> vector<4x8x32xbf16>
    %38 = vector.extract_strided_slice %19 {offsets = [0, 0], sizes = [8, 32], strides = [1, 1]} : vector<8x128xbf16> to vector<8x32xbf16>
    %39 = vector.extract_strided_slice %19 {offsets = [0, 32], sizes = [8, 32], strides = [1, 1]} : vector<8x128xbf16> to vector<8x32xbf16>
    %40 = vector.extract_strided_slice %19 {offsets = [0, 64], sizes = [8, 32], strides = [1, 1]} : vector<8x128xbf16> to vector<8x32xbf16>
    %41 = vector.extract_strided_slice %19 {offsets = [0, 96], sizes = [8, 32], strides = [1, 1]} : vector<8x128xbf16> to vector<8x32xbf16>
    %42 = vector.shape_cast %38 : vector<8x32xbf16> to vector<1x8x32xbf16>
    %43 = vector.shape_cast %39 : vector<8x32xbf16> to vector<1x8x32xbf16>
    %44 = vector.shape_cast %40 : vector<8x32xbf16> to vector<1x8x32xbf16>
    %45 = vector.shape_cast %41 : vector<8x32xbf16> to vector<1x8x32xbf16>
    %46 = tpu.concatenate %42, %43, %44, %45 in 0 : vector<1x8x32xbf16>, vector<1x8x32xbf16>, vector<1x8x32xbf16>, vector<1x8x32xbf16> -> vector<4x8x32xbf16>
    "tpu.trace_start"() <{level = 10 : i32, message = "hqd,hkd->hqk"}> : () -> ()
    %cst_9 = arith.constant dense<0.000000e+00> : vector<4x8x8xf32>
    %47 = tpu.matmul %28, %37, %cst_9 {dimension_numbers = #tpu.dot_dimension_numbers<[2], [2], [1], [1], [0, 0, 0, 1, 1, 1], [0], [0]>} : vector<4x8x32xbf16>, vector<4x8x32xbf16>, vector<4x8x8xf32> -> vector<4x8x8xf32>
    "tpu.trace_stop"() : () -> ()
    %c0_10 = arith.constant 0 : index
    %c0_11 = arith.constant 0 : index
    %c0_12 = arith.constant 0 : index
    %48 = vector.load %arg3[%c0_10, %c0_11, %c0_12] : memref<1x1x8xf32, #tpu.memory_space<vmem>>, vector<1x1x8xf32>
    %49 = vector.shape_cast %48 : vector<1x1x8xf32> to vector<1x8xf32>
    %50 = vector.shape_cast %49 : vector<1x8xf32> to vector<1x1x8xf32>
    %51 = vector.broadcast %50 : vector<1x1x8xf32> to vector<4x8x8xf32>
    %52 = arith.addf %47, %51 : vector<4x8x8xf32>
    %cst_13 = arith.constant dense<0xFF800000> : vector<4x8xf32>
    %53 = vector.multi_reduction <maximumf>, %52, %cst_13 [2] : vector<4x8x8xf32> to vector<4x8xf32>
    %54 = vector.shape_cast %53 : vector<4x8xf32> to vector<4x8x1xf32>
    %55 = vector.broadcast %54 : vector<4x8x1xf32> to vector<4x8x8xf32>
    %56 = arith.subf %52, %55 : vector<4x8x8xf32>
    %57 = math.exp %56 : vector<4x8x8xf32>
    %cst_14 = arith.constant dense<0.000000e+00> : vector<4x8xf32>
    %58 = vector.multi_reduction <add>, %57, %cst_14 [2] : vector<4x8x8xf32> to vector<4x8xf32>
    %59 = vector.shape_cast %58 : vector<4x8xf32> to vector<4x8x1xf32>
    %60 = tpu.reciprocal %59 {approx = true} : vector<4x8x1xf32> -> vector<4x8x1xf32>
    %61 = vector.broadcast %60 : vector<4x8x1xf32> to vector<4x8x8xf32>
    %62 = arith.mulf %57, %61 : vector<4x8x8xf32>
    %63 = arith.truncf %62 : vector<4x8x8xf32> to vector<4x8x8xbf16>
    "tpu.trace_start"() <{level = 10 : i32, message = "hqk,hkd->hqd"}> : () -> ()
    %cst_15 = arith.constant dense<0.000000e+00> : vector<4x8x32xf32>
    %64 = tpu.matmul %63, %46, %cst_15 {dimension_numbers = #tpu.dot_dimension_numbers<[2], [1], [1], [2], [0, 0, 0, 1, 1, 2], [0], [0]>} : vector<4x8x8xbf16>, vector<4x8x32xbf16>, vector<4x8x32xf32> -> vector<4x8x32xf32>
    "tpu.trace_stop"() : () -> ()
    %65 = vector.extract_strided_slice %64 {offsets = [0, 0, 0], sizes = [1, 8, 32], strides = [1, 1, 1]} : vector<4x8x32xf32> to vector<1x8x32xf32>
    %66 = vector.shape_cast %65 : vector<1x8x32xf32> to vector<8x32xf32>
    %c0_16 = arith.constant 0 : index
    %c0_17 = arith.constant 0 : index
    %67 = vector.load %arg18[%c0_16, %c0_17] : memref<8x128xf32, #tpu.memory_space<vmem>>, vector<8x32xf32>
    tpu.vector_store %arg18[%c0_16, %c0_17], %66 {strides = array<i32>} : memref<8x128xf32, #tpu.memory_space<vmem>>, vector<8x32xf32>,
    %68 = vector.extract_strided_slice %64 {offsets = [1, 0, 0], sizes = [1, 8, 32], strides = [1, 1, 1]} : vector<4x8x32xf32> to vector<1x8x32xf32>
    %69 = vector.shape_cast %68 : vector<1x8x32xf32> to vector<8x32xf32>
    %c0_18 = arith.constant 0 : index
    %c32 = arith.constant 32 : index
    %70 = vector.load %arg18[%c0_18, %c32] : memref<8x128xf32, #tpu.memory_space<vmem>>, vector<8x32xf32>
    tpu.vector_store %arg18[%c0_18, %c32], %69 {strides = array<i32>} : memref<8x128xf32, #tpu.memory_space<vmem>>, vector<8x32xf32>,
    %71 = vector.extract_strided_slice %64 {offsets = [2, 0, 0], sizes = [1, 8, 32], strides = [1, 1, 1]} : vector<4x8x32xf32> to vector<1x8x32xf32>
    %72 = vector.shape_cast %71 : vector<1x8x32xf32> to vector<8x32xf32>
    %c0_19 = arith.constant 0 : index
    %c64 = arith.constant 64 : index
    %73 = vector.load %arg18[%c0_19, %c64] : memref<8x128xf32, #tpu.memory_space<vmem>>, vector<8x32xf32>
    tpu.vector_store %arg18[%c0_19, %c64], %72 {strides = array<i32>} : memref<8x128xf32, #tpu.memory_space<vmem>>, vector<8x32xf32>,
    %74 = vector.extract_strided_slice %64 {offsets = [3, 0, 0], sizes = [1, 8, 32], strides = [1, 1, 1]} : vector<4x8x32xf32> to vector<1x8x32xf32>
    %75 = vector.shape_cast %74 : vector<1x8x32xf32> to vector<8x32xf32>
    %c0_20 = arith.constant 0 : index
    %c96 = arith.constant 96 : index
    %76 = vector.load %arg18[%c0_20, %c96] : memref<8x128xf32, #tpu.memory_space<vmem>>, vector<8x32xf32>
    tpu.vector_store %arg18[%c0_20, %c96], %75 {strides = array<i32>} : memref<8x128xf32, #tpu.memory_space<vmem>>, vector<8x32xf32>,
    %c0_21 = arith.constant 0 : index
    %c0_22 = arith.constant 0 : index
    %77 = vector.load %arg18[%c0_21, %c0_22] : memref<8x128xf32, #tpu.memory_space<vmem>>, vector<8x128xf32>
    %78 = arith.truncf %77 : vector<8x128xf32> to vector<8x128xbf16>
    %c0_23 = arith.constant 0 : index
    %c0_24 = arith.constant 0 : index
    %c0_25 = arith.constant 0 : index
    %79 = vector.load %arg6[%c0_23, %c0_24, %c0_25] : memref<1x128x128xbf16, #tpu.memory_space<vmem>>, vector<1x128x128xbf16>
    %80 = vector.shape_cast %79 : vector<1x128x128xbf16> to vector<128x128xbf16>
    %cst_26 = arith.constant dense<0.000000e+00> : vector<8x128xf32>
    %81 = tpu.matmul %78, %80, %cst_26 {dimension_numbers = #tpu.dot_dimension_numbers<[1], [0], [0], [1], [0, 0, 1, 1], [], []>} : vector<8x128xbf16>, vector<128x128xbf16>, vector<8x128xf32> -> vector<8x128xf32>
    %c0_27 = arith.constant 0 : index
    %c0_28 = arith.constant 0 : index
    %c0_29 = arith.constant 0 : index
    %82 = vector.load %arg7[%c0_27, %c0_28, %c0_29] : memref<1x1x128xf32, #tpu.memory_space<vmem>>, vector<1x1x128xf32>
    %83 = vector.shape_cast %82 : vector<1x1x128xf32> to vector<1x128xf32>
    %84 = vector.broadcast %83 : vector<1x128xf32> to vector<8x128xf32>
    %85 = arith.addf %81, %84 : vector<8x128xf32>
    %86 = arith.addf %85, %3 : vector<8x128xf32>
    %c0_30 = arith.constant 0 : index
    %c0_31 = arith.constant 0 : index
    %c0_32 = arith.constant 0 : index
    %87 = vector.load %arg8[%c0_30, %c0_31, %c0_32] : memref<1x1x128xf32, #tpu.memory_space<vmem>>, vector<1x1x128xf32>
    %88 = vector.shape_cast %87 : vector<1x1x128xf32> to vector<1x128xf32>
    %c0_33 = arith.constant 0 : index
    %c0_34 = arith.constant 0 : index
    %c0_35 = arith.constant 0 : index
    %89 = vector.load %arg9[%c0_33, %c0_34, %c0_35] : memref<1x1x128xf32, #tpu.memory_space<vmem>>, vector<1x1x128xf32>
    %90 = vector.shape_cast %89 : vector<1x1x128xf32> to vector<1x128xf32>
    %cst_36 = arith.constant dense<0.000000e+00> : vector<8xf32>
    %91 = vector.multi_reduction <add>, %86, %cst_36 [1] : vector<8x128xf32> to vector<8xf32>
    %92 = vector.shape_cast %91 : vector<8xf32> to vector<8x1xf32>
    %cst_37 = arith.constant 1.280000e+02 : f32
    %93 = vector.broadcast %cst_37 : f32 to vector<8x1xf32>
    %94 = arith.divf %92, %93 : vector<8x1xf32>
    %95 = vector.broadcast %94 : vector<8x1xf32> to vector<8x128xf32>
    %96 = arith.subf %86, %95 : vector<8x128xf32>
    %97 = arith.mulf %96, %96 : vector<8x128xf32>
    %cst_38 = arith.constant dense<0.000000e+00> : vector<8xf32>
    %98 = vector.multi_reduction <add>, %97, %cst_38 [1] : vector<8x128xf32> to vector<8xf32>
    %99 = vector.shape_cast %98 : vector<8xf32> to vector<8x1xf32>
    %cst_39 = arith.constant 1.280000e+02 : f32
    %100 = vector.broadcast %cst_39 : f32 to vector<8x1xf32>
    %101 = arith.divf %99, %100 : vector<8x1xf32>
    %102 = vector.broadcast %94 : vector<8x1xf32> to vector<8x128xf32>
    %103 = arith.subf %86, %102 : vector<8x128xf32>
    %cst_40 = arith.constant 9.99999996E-13 : f32
    %104 = vector.broadcast %cst_40 : f32 to vector<8x1xf32>
    %105 = arith.addf %101, %104 : vector<8x1xf32>
    %106 = math.rsqrt %105 : vector<8x1xf32>
    %107 = vector.broadcast %106 : vector<8x1xf32> to vector<8x128xf32>
    %108 = arith.mulf %103, %107 : vector<8x128xf32>
    %109 = vector.broadcast %88 : vector<1x128xf32> to vector<8x128xf32>
    %110 = arith.mulf %108, %109 : vector<8x128xf32>
    %111 = vector.broadcast %90 : vector<1x128xf32> to vector<8x128xf32>
    %112 = arith.addf %110, %111 : vector<8x128xf32>
    %113 = arith.truncf %112 : vector<8x128xf32> to vector<8x128xbf16>
    %c0_41 = arith.constant 0 : index
    %c0_42 = arith.constant 0 : index
    %c0_43 = arith.constant 0 : index
    %114 = vector.load %arg10[%c0_41, %c0_42, %c0_43] : memref<1x128x256xbf16, #tpu.memory_space<vmem>>, vector<1x128x256xbf16>
    %115 = vector.shape_cast %114 : vector<1x128x256xbf16> to vector<128x256xbf16>
    %cst_44 = arith.constant dense<0.000000e+00> : vector<8x256xf32>
    %116 = tpu.matmul %113, %115, %cst_44 {dimension_numbers = #tpu.dot_dimension_numbers<[1], [0], [0], [1], [0, 0, 1, 1], [], []>} : vector<8x128xbf16>, vector<128x256xbf16>, vector<8x256xf32> -> vector<8x256xf32>
    %c0_45 = arith.constant 0 : index
    %c0_46 = arith.constant 0 : index
    %c0_47 = arith.constant 0 : index
    %117 = vector.load %arg11[%c0_45, %c0_46, %c0_47] : memref<1x1x256xf32, #tpu.memory_space<vmem>>, vector<1x1x256xf32>
    %118 = vector.shape_cast %117 : vector<1x1x256xf32> to vector<1x256xf32>
    %119 = vector.broadcast %118 : vector<1x256xf32> to vector<8x256xf32>
    %120 = arith.addf %116, %119 : vector<8x256xf32>
    %121 = arith.mulf %120, %120 : vector<8x256xf32>
    %122 = arith.mulf %120, %121 : vector<8x256xf32>
    %cst_48 = arith.constant 4.471500e-02 : f32
    %123 = vector.broadcast %cst_48 : f32 to vector<8x256xf32>
    %124 = arith.mulf %123, %122 : vector<8x256xf32>
    %125 = arith.addf %120, %124 : vector<8x256xf32>
    %cst_49 = arith.constant 0.797884583 : f32
    %126 = vector.broadcast %cst_49 : f32 to vector<8x256xf32>
    %127 = arith.mulf %126, %125 : vector<8x256xf32>
    %128 = math.tanh %127 : vector<8x256xf32>
    %cst_50 = arith.constant 1.000000e+00 : f32
    %129 = vector.broadcast %cst_50 : f32 to vector<8x256xf32>
    %130 = arith.addf %129, %128 : vector<8x256xf32>
    %cst_51 = arith.constant 5.000000e-01 : f32
    %131 = vector.broadcast %cst_51 : f32 to vector<8x256xf32>
    %132 = arith.mulf %131, %130 : vector<8x256xf32>
    %133 = arith.mulf %120, %132 : vector<8x256xf32>
    %134 = arith.truncf %133 : vector<8x256xf32> to vector<8x256xbf16>
    %c0_52 = arith.constant 0 : index
    %c0_53 = arith.constant 0 : index
    %c0_54 = arith.constant 0 : index
    %135 = vector.load %arg12[%c0_52, %c0_53, %c0_54] : memref<1x256x128xbf16, #tpu.memory_space<vmem>>, vector<1x256x128xbf16>
    %136 = vector.shape_cast %135 : vector<1x256x128xbf16> to vector<256x128xbf16>
    %cst_55 = arith.constant dense<0.000000e+00> : vector<8x128xf32>
    %137 = tpu.matmul %134, %136, %cst_55 {dimension_numbers = #tpu.dot_dimension_numbers<[1], [0], [0], [1], [0, 0, 1, 1], [], []>} : vector<8x256xbf16>, vector<256x128xbf16>, vector<8x128xf32> -> vector<8x128xf32>
    %c0_56 = arith.constant 0 : index
    %c0_57 = arith.constant 0 : index
    %c0_58 = arith.constant 0 : index
    %138 = vector.load %arg13[%c0_56, %c0_57, %c0_58] : memref<1x1x128xf32, #tpu.memory_space<vmem>>, vector<1x1x128xf32>
    %139 = vector.shape_cast %138 : vector<1x1x128xf32> to vector<1x128xf32>
    %140 = vector.broadcast %139 : vector<1x128xf32> to vector<8x128xf32>
    %141 = arith.addf %137, %140 : vector<8x128xf32>
    %142 = arith.addf %141, %112 : vector<8x128xf32>
    %c0_59 = arith.constant 0 : index
    %c0_60 = arith.constant 0 : index
    %c0_61 = arith.constant 0 : index
    %143 = vector.load %arg14[%c0_59, %c0_60, %c0_61] : memref<1x1x128xf32, #tpu.memory_space<vmem>>, vector<1x1x128xf32>
    %144 = vector.shape_cast %143 : vector<1x1x128xf32> to vector<1x128xf32>
    %c0_62 = arith.constant 0 : index
    %c0_63 = arith.constant 0 : index
    %c0_64 = arith.constant 0 : index
    %145 = vector.load %arg15[%c0_62, %c0_63, %c0_64] : memref<1x1x128xf32, #tpu.memory_space<vmem>>, vector<1x1x128xf32>
    %146 = vector.shape_cast %145 : vector<1x1x128xf32> to vector<1x128xf32>
    %cst_65 = arith.constant dense<0.000000e+00> : vector<8xf32>
    %147 = vector.multi_reduction <add>, %142, %cst_65 [1] : vector<8x128xf32> to vector<8xf32>
    %148 = vector.shape_cast %147 : vector<8xf32> to vector<8x1xf32>
    %cst_66 = arith.constant 1.280000e+02 : f32
    %149 = vector.broadcast %cst_66 : f32 to vector<8x1xf32>
    %150 = arith.divf %148, %149 : vector<8x1xf32>
    %151 = vector.broadcast %150 : vector<8x1xf32> to vector<8x128xf32>
    %152 = arith.subf %142, %151 : vector<8x128xf32>
    %153 = arith.mulf %152, %152 : vector<8x128xf32>
    %cst_67 = arith.constant dense<0.000000e+00> : vector<8xf32>
    %154 = vector.multi_reduction <add>, %153, %cst_67 [1] : vector<8x128xf32> to vector<8xf32>
    %155 = vector.shape_cast %154 : vector<8xf32> to vector<8x1xf32>
    %cst_68 = arith.constant 1.280000e+02 : f32
    %156 = vector.broadcast %cst_68 : f32 to vector<8x1xf32>
    %157 = arith.divf %155, %156 : vector<8x1xf32>
    %158 = vector.broadcast %150 : vector<8x1xf32> to vector<8x128xf32>
    %159 = arith.subf %142, %158 : vector<8x128xf32>
    %cst_69 = arith.constant 9.99999996E-13 : f32
    %160 = vector.broadcast %cst_69 : f32 to vector<8x1xf32>
    %161 = arith.addf %157, %160 : vector<8x1xf32>
    %162 = math.rsqrt %161 : vector<8x1xf32>
    %163 = vector.broadcast %162 : vector<8x1xf32> to vector<8x128xf32>
    %164 = arith.mulf %159, %163 : vector<8x128xf32>
    %165 = vector.broadcast %144 : vector<1x128xf32> to vector<8x128xf32>
    %166 = arith.mulf %164, %165 : vector<8x128xf32>
    %167 = vector.broadcast %146 : vector<1x128xf32> to vector<8x128xf32>
    %168 = arith.addf %166, %167 : vector<8x128xf32>
    %c0_70 = arith.constant 0 : index
    %c0_71 = arith.constant 0 : index
    %169 = vector.load %arg17[%c0_70, %c0_71] : memref<8x128xf32, #tpu.memory_space<vmem>>, vector<8x128xf32>
    tpu.vector_store %arg17[%c0_70, %c0_71], %168 {strides = array<i32>} : memref<8x128xf32, #tpu.memory_space<vmem>>, vector<8x128xf32>,
    %c1_i32 = arith.constant 1 : i32
    %170 = arith.cmpi eq, %arg1, %c1_i32 : i32
    %171 = arith.extui %170 : i1 to i32
    %c0_i32_72 = arith.constant 0 : i32
    %172 = arith.cmpi ne, %171, %c0_i32_72 : i32
    scf.if %172 {
      %173 = vector.extract_strided_slice %168 {offsets = [0, 0], sizes = [1, 128], strides = [1, 1]} : vector<8x128xf32> to vector<1x128xf32>
      %c0_73 = arith.constant 0 : index
      %c0_74 = arith.constant 0 : index
      %c0_75 = arith.constant 0 : index
      %174 = vector.load %arg16[%c0_73, %c0_74, %c0_75] : memref<1x1x128xf32, #tpu.memory_space<vmem>>, vector<1x1x128xf32>
      %175 = vector.shape_cast %174 : vector<1x1x128xf32> to vector<1x128xf32>
      %176 = vector.shape_cast %173 : vector<1x128xf32> to vector<1x1x128xf32>
      tpu.vector_store %arg16[%c0_73, %c0_74, %c0_75], %176 {strides = array<i32>} : memref<1x1x128xf32, #tpu.memory_space<vmem>>, vector<1x1x128xf32>,
    } else {
    }
    return
  }
  func.func @transform_0(%arg0: i32, %arg1: i32) -> (i32, i32, i32) {
    %c0_i32 = arith.constant 0 : i32
    %c0_i32_0 = arith.constant 0 : i32
    %c0_i32_1 = arith.constant 0 : i32
    return %arg0, %c0_i32, %c0_i32_0 : i32, i32, i32
  }
  func.func @transform_1(%arg0: i32, %arg1: i32) -> (i32, i32, i32) {
    %c0_i32 = arith.constant 0 : i32
    %c0_i32_0 = arith.constant 0 : i32
    %c0_i32_1 = arith.constant 0 : i32
    return %arg0, %c0_i32, %c0_i32_0 : i32, i32, i32
  }
  func.func @transform_2(%arg0: i32, %arg1: i32) -> (i32, i32, i32) {
    %c0_i32 = arith.constant 0 : i32
    %c0_i32_0 = arith.constant 0 : i32
    %c0_i32_1 = arith.constant 0 : i32
    return %arg1, %c0_i32, %c0_i32_0 : i32, i32, i32
  }
  func.func @transform_3(%arg0: i32, %arg1: i32) -> (i32, i32, i32) {
    %c0_i32 = arith.constant 0 : i32
    %c0_i32_0 = arith.constant 0 : i32
    %c0_i32_1 = arith.constant 0 : i32
    return %arg1, %c0_i32, %c0_i32_0 : i32, i32, i32
  }
  func.func @transform_4(%arg0: i32, %arg1: i32) -> (i32, i32, i32) {
    %c0_i32 = arith.constant 0 : i32
    %c0_i32_0 = arith.constant 0 : i32
    %c0_i32_1 = arith.constant 0 : i32
    return %arg1, %c0_i32, %c0_i32_0 : i32, i32, i32
  }
  func.func @transform_5(%arg0: i32, %arg1: i32) -> (i32, i32, i32) {
    %c0_i32 = arith.constant 0 : i32
    %c0_i32_0 = arith.constant 0 : i32
    %c0_i32_1 = arith.constant 0 : i32
    return %arg1, %c0_i32, %c0_i32_0 : i32, i32, i32
  }
  func.func @transform_6(%arg0: i32, %arg1: i32) -> (i32, i32, i32) {
    %c0_i32 = arith.constant 0 : i32
    %c0_i32_0 = arith.constant 0 : i32
    %c0_i32_1 = arith.constant 0 : i32
    return %arg1, %c0_i32, %c0_i32_0 : i32, i32, i32
  }
  func.func @transform_7(%arg0: i32, %arg1: i32) -> (i32, i32, i32) {
    %c0_i32 = arith.constant 0 : i32
    %c0_i32_0 = arith.constant 0 : i32
    %c0_i32_1 = arith.constant 0 : i32
    return %arg1, %c0_i32, %c0_i32_0 : i32, i32, i32
  }
  func.func @transform_8(%arg0: i32, %arg1: i32) -> (i32, i32, i32) {
    %c0_i32 = arith.constant 0 : i32
    %c0_i32_0 = arith.constant 0 : i32
    %c0_i32_1 = arith.constant 0 : i32
    return %arg1, %c0_i32, %c0_i32_0 : i32, i32, i32
  }
  func.func @transform_9(%arg0: i32, %arg1: i32) -> (i32, i32, i32) {
    %c0_i32 = arith.constant 0 : i32
    %c0_i32_0 = arith.constant 0 : i32
    %c0_i32_1 = arith.constant 0 : i32
    return %arg1, %c0_i32, %c0_i32_0 : i32, i32, i32
  }
  func.func @transform_10(%arg0: i32, %arg1: i32) -> (i32, i32, i32) {
    %c0_i32 = arith.constant 0 : i32
    %c0_i32_0 = arith.constant 0 : i32
    %c0_i32_1 = arith.constant 0 : i32
    return %arg1, %c0_i32, %c0_i32_0 : i32, i32, i32
  }
  func.func @transform_11(%arg0: i32, %arg1: i32) -> (i32, i32, i32) {
    %c0_i32 = arith.constant 0 : i32
    %c0_i32_0 = arith.constant 0 : i32
    %c0_i32_1 = arith.constant 0 : i32
    return %arg1, %c0_i32, %c0_i32_0 : i32, i32, i32
  }
  func.func @transform_12(%arg0: i32, %arg1: i32) -> (i32, i32, i32) {
    %c0_i32 = arith.constant 0 : i32
    %c0_i32_0 = arith.constant 0 : i32
    %c0_i32_1 = arith.constant 0 : i32
    return %arg1, %c0_i32, %c0_i32_0 : i32, i32, i32
  }
  func.func @transform_13(%arg0: i32, %arg1: i32) -> (i32, i32, i32) {
    %c0_i32 = arith.constant 0 : i32
    %c0_i32_0 = arith.constant 0 : i32
    %c0_i32_1 = arith.constant 0 : i32
    return %arg1, %c0_i32, %c0_i32_0 : i32, i32, i32
  }
  func.func @transform_14(%arg0: i32, %arg1: i32) -> (i32, i32, i32) {
    %c0_i32 = arith.constant 0 : i32
    %c0_i32_0 = arith.constant 0 : i32
    %c0_i32_1 = arith.constant 0 : i32
    return %arg0, %c0_i32, %c0_i32_0 : i32, i32, i32
  }
}

</mosaic_0001>

<llo_original>
// kernel: xlnet_encoder_forward.1
$region0: #{xlnet_encoder_forward.1}
  #allocation0 [shape = 'u32[]', space=smem, size = 0x4, offset = 0x4, fixed_abs, tag = 'smem constant byte address 0x4 - core index']
  #allocation1 [shape = 'u32[144,128]{1,0:T(1,128)}', space=vmem, size = 0x12000, scoped, tag = 'internal scratch']
  #allocation2 [shape = 'f32[8,128]{1,0:T(8,128)}', space=vmem, size = 0x1000, scoped, tag = 'scratch operand']
  #allocation3 [shape = 'f32[8,128]{1,0:T(8,128)}', space=vmem, size = 0x1000, scoped, tag = 'scratch operand']
  %s0 = inlined_call_operand.vmem [shape: f32[2,8,128], index: 0, kind: input, shape index: {}]
  %s1 = inlined_call_operand.vmem [shape: f32[2,1,8], index: 1, kind: input, shape index: {}]
  %s2 = inlined_call_operand.hbm [shape: bf16[2,128,384], index: 2, kind: input, shape index: {}]
  %s3 = inlined_call_operand.vmem [shape: f32[2,1,384], index: 3, kind: input, shape index: {}]
  %s4 = inlined_call_operand.vmem [shape: bf16[2,128,128], index: 4, kind: input, shape index: {}]
  %s5 = inlined_call_operand.vmem [shape: f32[2,1,128], index: 5, kind: input, shape index: {}]
  %s6 = inlined_call_operand.vmem [shape: f32[2,1,128], index: 6, kind: input, shape index: {}]
  %s7 = inlined_call_operand.vmem [shape: f32[2,1,128], index: 7, kind: input, shape index: {}]
  %s8 = inlined_call_operand.hbm [shape: bf16[2,128,256], index: 8, kind: input, shape index: {}]
  %s9 = inlined_call_operand.vmem [shape: f32[2,1,256], index: 9, kind: input, shape index: {}]
  %s10 = inlined_call_operand.hbm [shape: bf16[2,256,128], index: 10, kind: input, shape index: {}]
  %s11 = inlined_call_operand.vmem [shape: f32[2,1,128], index: 11, kind: input, shape index: {}]
  %s12 = inlined_call_operand.vmem [shape: f32[2,1,128], index: 12, kind: input, shape index: {}]
  %s13 = inlined_call_operand.vmem [shape: f32[2,1,128], index: 13, kind: input, shape index: {}]
  %s14 = inlined_call_operand.hbm [shape: f32[2,1,128], index: 14, kind: output, shape index: {}]
  %s15 = sld [smem:[#allocation0]]
  $region109: #{xlnet_encoder_forward.1} parent=0
    _
  %s17 = ssub.s32 1, %s15
  %s18 = scalar_select 0, %s17, %s15
  $region1: #{xlnet_encoder_forward.1} parent=0
    #allocation4 [shape = 'u8[196608]{0}', space=vmem, size = 0x30000, scoped, tag = 'input window, operand 2']
    #allocation5 [shape = 's32[2]{0}', space=sflag, size = 0x8, scoped, tag = 'scoped memory for xlnet_encoder_forward.1']
    #allocation6 [shape = 's32[2]{0}', space=sflag, size = 0x8, scoped, tag = 'scoped memory for xlnet_encoder_forward.1']
    #allocation7 [shape = 'u8[131072]{0}', space=vmem, size = 0x20000, scoped, tag = 'input window, operand 8']
    #allocation8 [shape = 's32[2]{0}', space=sflag, size = 0x8, scoped, tag = 'scoped memory for xlnet_encoder_forward.1']
    #allocation9 [shape = 'u8[131072]{0}', space=vmem, size = 0x20000, scoped, tag = 'input window, operand 10']
    #allocation10 [shape = 'u8[1024]{0}', space=vmem, size = 0x400, scoped, tag = 'output window, operand 0']
    %19 = vsyncpa [#allocation5], 0
    %s20 = scalar_lea.sflag [#allocation5], 1
    %21 = vsyncpa %s20, 0
    %22 = vsyncpa [#allocation8], 0
    %s23 = scalar_lea.sflag [#allocation8], 1
    %24 = vsyncpa %s23, 0
    %25 = vsyncpa [#allocation6], 0
    %s26 = scalar_lea.sflag [#allocation6], 1
    %27 = vsyncpa %s26, 0
    loop: start=0, step=1, limit=6
    $region2: #{xlnet_encoder_forward.1} parent=1 // loop_pre_header
      _
    $region3: #{xlnet_encoder_forward.1} parent=1 // loop_header
      %s29 = sphi 0, %s33
      %p30 = scmp.ge.s32.totalorder %s29, 6
      %s36 = sphi 0, %s48
      %s37 = sphi 0, %s44
      %s38 = sphi 0, %s36
      %s39 = sphi 0, %s37
      %s40 = sphi 0, %s38
      %s41 = sphi 0, %s39
      %s51 = sphi 0, %s53
      %s54 = sphi 0, %s51
      %s55 = sphi 0, %s54
      %s71 = sphi 0, %s55
      %s77 = sphi 0, %s79
      %s80 = sphi 0, %s77
      %s81 = sphi 0, %s80
      %s97 = sphi 0, %s81
      %s103 = sphi 0, %s105
      %s106 = sphi 0, %s103
      %s107 = sphi 0, %s106
      %s123 = sphi 0, %s107
      %s129 = sphi 0, %s131
      %s132 = sphi 0, %s129
      %s133 = sphi 0, %s132
      %s149 = sphi 0, %s133
      %s155 = sphi 0, %s157
      %s158 = sphi 0, %s155
      %s159 = sphi 0, %s158
      %s175 = sphi 0, %s159
      %s181 = sphi 0, %s183
      %s184 = sphi 0, %s181
      %s185 = sphi 0, %s184
      %s201 = sphi 0, %s185
      %s207 = sphi 0, %s209
      %s210 = sphi 0, %s207
      %s211 = sphi 0, %s210
      %s227 = sphi 0, %s211
      %s233 = sphi 0, %s235
      %s236 = sphi 0, %s233
      %s237 = sphi 0, %s236
      %s253 = sphi 0, %s237
      %s259 = sphi 0, %s261
      %s262 = sphi 0, %s259
      %s263 = sphi 0, %s262
      %s279 = sphi 0, %s263
      %s285 = sphi 0, %s287
      %s288 = sphi 0, %s285
      %s289 = sphi 0, %s288
      %s305 = sphi 0, %s289
      %s311 = sphi 0, %s313
      %s314 = sphi 0, %s311
      %s315 = sphi 0, %s314
      %s331 = sphi 0, %s315
      %s337 = sphi 0, %s339
      %s340 = sphi 0, %s337
      %s341 = sphi 0, %s340
      %s357 = sphi 0, %s341
      %s363 = sphi 0, %s365
      %s366 = sphi 0, %s363
      %s367 = sphi 0, %s366
      %s383 = sphi 0, %s367
      %s389 = sphi 0, %s391
      %s392 = sphi 0, %s389
      %s393 = sphi 0, %s392
      %s409 = sphi 0, %s393
      %s415 = sphi 0, %s417
      %s418 = sphi 0, %s415
      %s419 = sphi 0, %s418
      %s435 = sphi 0, %s419
    $region4: #{xlnet_encoder_forward.1} parent=1 // loop_header_branch
      %32 = sbr.rel (%p30) target = $region8
    $region5: #{xlnet_encoder_forward.1} parent=1 // loop_body
      %s34 = ssub.s32 %s29, 1
      %s35 = ssub.s32 %s29, 2
      %s42 = sadd.s32 1, %s37
      %p43 = scmp.ge.s32.totalorder %s42, 2
      %s44 = scalar_select %p43, 0, %s42
      %s45 = sadd.s32 1, %s36
      %s46 = scalar_select %p43, %s45, %s36
      %p47 = scmp.ge.s32.totalorder %s46, 2
      %s48 = scalar_select %p47, 0, %s46
      %s49 = ssub.s32 %s36, %s48
      %p50 = scmp.eq.s32.totalorder %s49, 0
      %s52 = sadd.s32 %s51, 1
      %s53 = scalar_select %p50, %s51, %s52
      %p56 = pneg %p50
      %p57 = scmp.eq.s32.totalorder %s29, 3
      %p58 = por %p56, %p57
      %p59 = scmp.ne.s32.totalorder %s51, %s54
      %p60 = scmp.eq.s32.totalorder %s29, 0
      %p61 = por %p59, %p60
      %p62 = scmp.ne.s32.totalorder %s51, %s54
      %p63 = scmp.eq.s32.totalorder %s34, 3
      %p64 = por %p62, %p63
      %p65 = scmp.ne.s32.totalorder %s54, %s55
      %p66 = scmp.eq.s32.totalorder %s34, 0
      %p67 = por %p65, %p66
      %p68 = scmp.ne.s32.totalorder %s54, %s55
      %p69 = scmp.eq.s32.totalorder %s35, 3
      %p70 = por %p68, %p69
      %p72 = scmp.ne.s32.totalorder %s55, %s71
      %p73 = scmp.eq.s32.totalorder %s35, 0
      %p74 = por %p72, %p73
      %s75 = ssub.s32 %s36, %s48
      %p76 = scmp.eq.s32.totalorder %s75, 0
      %s78 = sadd.s32 %s77, 1
      %s79 = scalar_select %p76, %s77, %s78
      %p82 = pneg %p76
      %p83 = scmp.eq.s32.totalorder %s29, 3
      %p84 = por %p82, %p83
      %p85 = scmp.ne.s32.totalorder %s77, %s80
      %p86 = scmp.eq.s32.totalorder %s29, 0
      %p87 = por %p85, %p86
      %p88 = scmp.ne.s32.totalorder %s77, %s80
      %p89 = scmp.eq.s32.totalorder %s34, 3
      %p90 = por %p88, %p89
      %p91 = scmp.ne.s32.totalorder %s80, %s81
      %p92 = scmp.eq.s32.totalorder %s34, 0
      %p93 = por %p91, %p92
      %p94 = scmp.ne.s32.totalorder %s80, %s81
      %p95 = scmp.eq.s32.totalorder %s35, 3
      %p96 = por %p94, %p95
      %p98 = scmp.ne.s32.totalorder %s81, %s97
      %p99 = scmp.eq.s32.totalorder %s35, 0
      %p100 = por %p98, %p99
      %s101 = ssub.s32 %s37, %s44
      %p102 = scmp.eq.s32.totalorder %s101, 0
      %s104 = sadd.s32 %s103, 1
      %s105 = scalar_select %p102, %s103, %s104
      %p108 = pneg %p102
      %p109 = scmp.eq.s32.totalorder %s29, 3
      %p110 = por %p108, %p109
      %p111 = scmp.ne.s32.totalorder %s103, %s106
      %p112 = scmp.eq.s32.totalorder %s29, 0
      %p113 = por %p111, %p112
      %p114 = scmp.ne.s32.totalorder %s103, %s106
      %p115 = scmp.eq.s32.totalorder %s34, 3
      %p116 = por %p114, %p115
      %p117 = scmp.ne.s32.totalorder %s106, %s107
      %p118 = scmp.eq.s32.totalorder %s34, 0
      %p119 = por %p117, %p118
      %p120 = scmp.ne.s32.totalorder %s106, %s107
      %p121 = scmp.eq.s32.totalorder %s35, 3
      %p122 = por %p120, %p121
      %p124 = scmp.ne.s32.totalorder %s107, %s123
      %p125 = scmp.eq.s32.totalorder %s35, 0
      %p126 = por %p124, %p125
      %s127 = ssub.s32 %s37, %s44
      %p128 = scmp.eq.s32.totalorder %s127, 0
      %s130 = sadd.s32 %s129, 1
      %s131 = scalar_select %p128, %s129, %s130
      %p134 = pneg %p128
      %p135 = scmp.eq.s32.totalorder %s29, 3
      %p136 = por %p134, %p135
      %p137 = scmp.ne.s32.totalorder %s129, %s132
      %p138 = scmp.eq.s32.totalorder %s29, 0
      %p139 = por %p137, %p138
      %p140 = scmp.ne.s32.totalorder %s129, %s132
      %p141 = scmp.eq.s32.totalorder %s34, 3
      %p142 = por %p140, %p141
      %p143 = scmp.ne.s32.totalorder %s132, %s133
      %p144 = scmp.eq.s32.totalorder %s34, 0
      %p145 = por %p143, %p144
      %p146 = scmp.ne.s32.totalorder %s132, %s133
      %p147 = scmp.eq.s32.totalorder %s35, 3
      %p148 = por %p146, %p147
      %p150 = scmp.ne.s32.totalorder %s133, %s149
      %p151 = scmp.eq.s32.totalorder %s35, 0
      %p152 = por %p150, %p151
      %s153 = ssub.s32 %s37, %s44
      %p154 = scmp.eq.s32.totalorder %s153, 0
      %s156 = sadd.s32 %s155, 1
      %s157 = scalar_select %p154, %s155, %s156
      %p160 = pneg %p154
      %p161 = scmp.eq.s32.totalorder %s29, 3
      %p162 = por %p160, %p161
      %p163 = scmp.ne.s32.totalorder %s155, %s158
      %p164 = scmp.eq.s32.totalorder %s29, 0
      %p165 = por %p163, %p164
      %p166 = scmp.ne.s32.totalorder %s155, %s158
      %p167 = scmp.eq.s32.totalorder %s34, 3
      %p168 = por %p166, %p167
      %p169 = scmp.ne.s32.totalorder %s158, %s159
      %p170 = scmp.eq.s32.totalorder %s34, 0
      %p171 = por %p169, %p170
      %p172 = scmp.ne.s32.totalorder %s158, %s159
      %p173 = scmp.eq.s32.totalorder %s35, 3
      %p174 = por %p172, %p173
      %p176 = scmp.ne.s32.totalorder %s159, %s175
      %p177 = scmp.eq.s32.totalorder %s35, 0
      %p178 = por %p176, %p177
      %s179 = ssub.s32 %s37, %s44
      %p180 = scmp.eq.s32.totalorder %s179, 0
      %s182 = sadd.s32 %s181, 1
      %s183 = scalar_select %p180, %s181, %s182
      %p186 = pneg %p180
      %p187 = scmp.eq.s32.totalorder %s29, 3
      %p188 = por %p186, %p187
      %p189 = scmp.ne.s32.totalorder %s181, %s184
      %p190 = scmp.eq.s32.totalorder %s29, 0
      %p191 = por %p189, %p190
      %p192 = scmp.ne.s32.totalorder %s181, %s184
      %p193 = scmp.eq.s32.totalorder %s34, 3
      %p194 = por %p192, %p193
      %p195 = scmp.ne.s32.totalorder %s184, %s185
      %p196 = scmp.eq.s32.totalorder %s34, 0
      %p197 = por %p195, %p196
      %p198 = scmp.ne.s32.totalorder %s184, %s185
      %p199 = scmp.eq.s32.totalorder %s35, 3
      %p200 = por %p198, %p199
      %p202 = scmp.ne.s32.totalorder %s185, %s201
      %p203 = scmp.eq.s32.totalorder %s35, 0
      %p204 = por %p202, %p203
      %s205 = ssub.s32 %s37, %s44
      %p206 = scmp.eq.s32.totalorder %s205, 0
      %s208 = sadd.s32 %s207, 1
      %s209 = scalar_select %p206, %s207, %s208
      %p212 = pneg %p206
      %p213 = scmp.eq.s32.totalorder %s29, 3
      %p214 = por %p212, %p213
      %p215 = scmp.ne.s32.totalorder %s207, %s210
      %p216 = scmp.eq.s32.totalorder %s29, 0
      %p217 = por %p215, %p216
      %p218 = scmp.ne.s32.totalorder %s207, %s210
      %p219 = scmp.eq.s32.totalorder %s34, 3
      %p220 = por %p218, %p219
      %p221 = scmp.ne.s32.totalorder %s210, %s211
      %p222 = scmp.eq.s32.totalorder %s34, 0
      %p223 = por %p221, %p222
      %p224 = scmp.ne.s32.totalorder %s210, %s211
      %p225 = scmp.eq.s32.totalorder %s35, 3
      %p226 = por %p224, %p225
      %p228 = scmp.ne.s32.totalorder %s211, %s227
      %p229 = scmp.eq.s32.totalorder %s35, 0
      %p230 = por %p228, %p229
      %s231 = ssub.s32 %s37, %s44
      %p232 = scmp.eq.s32.totalorder %s231, 0
      %s234 = sadd.s32 %s233, 1
      %s235 = scalar_select %p232, %s233, %s234
      %p238 = pneg %p232
      %p239 = scmp.eq.s32.totalorder %s29, 3
      %p240 = por %p238, %p239
      %p241 = scmp.ne.s32.totalorder %s233, %s236
      %p242 = scmp.eq.s32.totalorder %s29, 0
      %p243 = por %p241, %p242
      %p244 = scmp.ne.s32.totalorder %s233, %s236
      %p245 = scmp.eq.s32.totalorder %s34, 3
      %p246 = por %p244, %p245
      %p247 = scmp.ne.s32.totalorder %s236, %s237
      %p248 = scmp.eq.s32.totalorder %s34, 0
      %p249 = por %p247, %p248
      %p250 = scmp.ne.s32.totalorder %s236, %s237
      %p251 = scmp.eq.s32.totalorder %s35, 3
      %p252 = por %p250, %p251
      %p254 = scmp.ne.s32.totalorder %s237, %s253
      %p255 = scmp.eq.s32.totalorder %s35, 0
      %p256 = por %p254, %p255
      %s257 = ssub.s32 %s37, %s44
      %p258 = scmp.eq.s32.totalorder %s257, 0
      %s260 = sadd.s32 %s259, 1
      %s261 = scalar_select %p258, %s259, %s260
      %p264 = pneg %p258
      %p265 = scmp.eq.s32.totalorder %s29, 3
      %p266 = por %p264, %p265
      %p267 = scmp.ne.s32.totalorder %s259, %s262
      %p268 = scmp.eq.s32.totalorder %s29, 0
      %p269 = por %p267, %p268
      %p270 = scmp.ne.s32.totalorder %s259, %s262
      %p271 = scmp.eq.s32.totalorder %s34, 3
      %p272 = por %p270, %p271
      %p273 = scmp.ne.s32.totalorder %s262, %s263
      %p274 = scmp.eq.s32.totalorder %s34, 0
      %p275 = por %p273, %p274
      %p276 = scmp.ne.s32.totalorder %s262, %s263
      %p277 = scmp.eq.s32.totalorder %s35, 3
      %p278 = por %p276, %p277
      %p280 = scmp.ne.s32.totalorder %s263, %s279
      %p281 = scmp.eq.s32.totalorder %s35, 0
      %p282 = por %p280, %p281
      %s283 = ssub.s32 %s37, %s44
      %p284 = scmp.eq.s32.totalorder %s283, 0
      %s286 = sadd.s32 %s285, 1
      %s287 = scalar_select %p284, %s285, %s286
      %p290 = pneg %p284
      %p291 = scmp.eq.s32.totalorder %s29, 3
      %p292 = por %p290, %p291
      %p293 = scmp.ne.s32.totalorder %s285, %s288
      %p294 = scmp.eq.s32.totalorder %s29, 0
      %p295 = por %p293, %p294
      %p296 = scmp.ne.s32.totalorder %s285, %s288
      %p297 = scmp.eq.s32.totalorder %s34, 3
      %p298 = por %p296, %p297
      %p299 = scmp.ne.s32.totalorder %s288, %s289
      %p300 = scmp.eq.s32.totalorder %s34, 0
      %p301 = por %p299, %p300
      %p302 = scmp.ne.s32.totalorder %s288, %s289
      %p303 = scmp.eq.s32.totalorder %s35, 3
      %p304 = por %p302, %p303
      %p306 = scmp.ne.s32.totalorder %s289, %s305
      %p307 = scmp.eq.s32.totalorder %s35, 0
      %p308 = por %p306, %p307
      %s309 = ssub.s32 %s37, %s44
      %p310 = scmp.eq.s32.totalorder %s309, 0
      %s312 = sadd.s32 %s311, 1
      %s313 = scalar_select %p310, %s311, %s312
      %p316 = pneg %p310
      %p317 = scmp.eq.s32.totalorder %s29, 3
      %p318 = por %p316, %p317
      %p319 = scmp.ne.s32.totalorder %s311, %s314
      %p320 = scmp.eq.s32.totalorder %s29, 0
      %p321 = por %p319, %p320
      %p322 = scmp.ne.s32.totalorder %s311, %s314
      %p323 = scmp.eq.s32.totalorder %s34, 3
      %p324 = por %p322, %p323
      %p325 = scmp.ne.s32.totalorder %s314, %s315
      %p326 = scmp.eq.s32.totalorder %s34, 0
      %p327 = por %p325, %p326
      %p328 = scmp.ne.s32.totalorder %s314, %s315
      %p329 = scmp.eq.s32.totalorder %s35, 3
      %p330 = por %p328, %p329
      %p332 = scmp.ne.s32.totalorder %s315, %s331
      %p333 = scmp.eq.s32.totalorder %s35, 0
      %p334 = por %p332, %p333
      %s335 = ssub.s32 %s37, %s44
      %p336 = scmp.eq.s32.totalorder %s335, 0
      %s338 = sadd.s32 %s337, 1
      %s339 = scalar_select %p336, %s337, %s338
      %p342 = pneg %p336
      %p343 = scmp.eq.s32.totalorder %s29, 3
      %p344 = por %p342, %p343
      %p345 = scmp.ne.s32.totalorder %s337, %s340
      %p346 = scmp.eq.s32.totalorder %s29, 0
      %p347 = por %p345, %p346
      %p348 = scmp.ne.s32.totalorder %s337, %s340
      %p349 = scmp.eq.s32.totalorder %s34, 3
      %p350 = por %p348, %p349
      %p351 = scmp.ne.s32.totalorder %s340, %s341
      %p352 = scmp.eq.s32.totalorder %s34, 0
      %p353 = por %p351, %p352
      %p354 = scmp.ne.s32.totalorder %s340, %s341
      %p355 = scmp.eq.s32.totalorder %s35, 3
      %p356 = por %p354, %p355
      %p358 = scmp.ne.s32.totalorder %s341, %s357
      %p359 = scmp.eq.s32.totalorder %s35, 0
      %p360 = por %p358, %p359
      %s361 = ssub.s32 %s37, %s44
      %p362 = scmp.eq.s32.totalorder %s361, 0
      %s364 = sadd.s32 %s363, 1
      %s365 = scalar_select %p362, %s363, %s364
      %p368 = pneg %p362
      %p369 = scmp.eq.s32.totalorder %s29, 3
      %p370 = por %p368, %p369
      %p371 = scmp.ne.s32.totalorder %s363, %s366
      %p372 = scmp.eq.s32.totalorder %s29, 0
      %p373 = por %p371, %p372
      %p374 = scmp.ne.s32.totalorder %s363, %s366
      %p375 = scmp.eq.s32.totalorder %s34, 3
      %p376 = por %p374, %p375
      %p377 = scmp.ne.s32.totalorder %s366, %s367
      %p378 = scmp.eq.s32.totalorder %s34, 0
      %p379 = por %p377, %p378
      %p380 = scmp.ne.s32.totalorder %s366, %s367
      %p381 = scmp.eq.s32.totalorder %s35, 3
      %p382 = por %p380, %p381
      %p384 = scmp.ne.s32.totalorder %s367, %s383
      %p385 = scmp.eq.s32.totalorder %s35, 0
      %p386 = por %p384, %p385
      %s387 = ssub.s32 %s37, %s44
      %p388 = scmp.eq.s32.totalorder %s387, 0
      %s390 = sadd.s32 %s389, 1
      %s391 = scalar_select %p388, %s389, %s390
      %p394 = pneg %p388
      %p395 = scmp.eq.s32.totalorder %s29, 3
      %p396 = por %p394, %p395
      %p397 = scmp.ne.s32.totalorder %s389, %s392
      %p398 = scmp.eq.s32.totalorder %s29, 0
      %p399 = por %p397, %p398
      %p400 = scmp.ne.s32.totalorder %s389, %s392
      %p401 = scmp.eq.s32.totalorder %s34, 3
      %p402 = por %p400, %p401
      %p403 = scmp.ne.s32.totalorder %s392, %s393
      %p404 = scmp.eq.s32.totalorder %s34, 0
      %p405 = por %p403, %p404
      %p406 = scmp.ne.s32.totalorder %s392, %s393
      %p407 = scmp.eq.s32.totalorder %s35, 3
      %p408 = por %p406, %p407
      %p410 = scmp.ne.s32.totalorder %s393, %s409
      %p411 = scmp.eq.s32.totalorder %s35, 0
      %p412 = por %p410, %p411
      %s413 = ssub.s32 %s36, %s48
      %p414 = scmp.eq.s32.totalorder %s413, 0
      %s416 = sadd.s32 %s415, 1
      %s417 = scalar_select %p414, %s415, %s416
      %p420 = pneg %p414
      %p421 = scmp.eq.s32.totalorder %s29, 3
      %p422 = por %p420, %p421
      %p423 = scmp.ne.s32.totalorder %s415, %s418
      %p424 = scmp.eq.s32.totalorder %s29, 0
      %p425 = por %p423, %p424
      %p426 = scmp.ne.s32.totalorder %s415, %s418
      %p427 = scmp.eq.s32.totalorder %s34, 3
      %p428 = por %p426, %p427
      %p429 = scmp.ne.s32.totalorder %s418, %s419
      %p430 = scmp.eq.s32.totalorder %s34, 0
      %p431 = por %p429, %p430
      %p432 = scmp.ne.s32.totalorder %s418, %s419
      %p433 = scmp.eq.s32.totalorder %s35, 3
      %p434 = por %p432, %p433
      %p436 = scmp.ne.s32.totalorder %s419, %s435
      %p437 = scmp.eq.s32.totalorder %s35, 0
      %p438 = por %p436, %p437
      %p439 = scmp.le.s32.totalorder 1, %s29
      %p440 = scmp.lt.s32.totalorder %s29, 5
      %p441 = pnand %p439, %p440
      %p442 = pneg %p441
      // Predicated region
      $region9: #{xlnet_encoder_forward.1} parent=5 // pred_check
        _
      $region10: #{xlnet_encoder_forward.1} parent=5 // pred_check_branch
        %444 = sbr.rel (%p441) target = $region12
      $region11: #{xlnet_encoder_forward.1} parent=5 // pred_region
        %s445 = ssub.s32 %s29, 1
      $region12: #{xlnet_encoder_forward.1} parent=5 // pred_fallthru
        _
      %p446 = scmp.lt.s32.totalorder %s29, 4
      // Predicated region
      $region13: #{xlnet_encoder_forward.1} parent=5 // pred_check
        %p447 = pneg %p446
      $region14: #{xlnet_encoder_forward.1} parent=5 // pred_check_branch
        %449 = sbr.rel (%p447) target = $region16
      $region15: #{xlnet_encoder_forward.1} parent=5 // pred_region
        // Predicated region
        $region17: #{xlnet_encoder_forward.1} parent=15 // pred_check
          %p450 = pneg %p61
        $region18: #{xlnet_encoder_forward.1} parent=15 // pred_check_branch
          %452 = sbr.rel (%p450) target = $region20
        $region19: #{xlnet_encoder_forward.1} parent=15 // pred_region
          %p453 = scmp.lt.s32.totalorder %s36, 1
          %s454 = scalar_select %p453, %s36, 1
          %s455 = smul.addr %s454, 8
          %s456 = scalar_lea.vmem %s0, %s455
        $region20: #{xlnet_encoder_forward.1} parent=15 // pred_fallthru
          _
        // Predicated region
        $region21: #{xlnet_encoder_forward.1} parent=15 // pred_check
          %p457 = pneg %p87
        $region22: #{xlnet_encoder_forward.1} parent=15 // pred_check_branch
          %459 = sbr.rel (%p457) target = $region24
        $region23: #{xlnet_encoder_forward.1} parent=15 // pred_region
          %p460 = scmp.lt.s32.totalorder %s36, 1
          %s461 = scalar_select %p460, %s36, 1
          %s462 = scalar_lea.vmem %s1, %s461
        $region24: #{xlnet_encoder_forward.1} parent=15 // pred_fallthru
          _
        // Predicated region
        $region25: #{xlnet_encoder_forward.1} parent=15 // pred_check
          %p463 = pneg %p113
        $region26: #{xlnet_encoder_forward.1} parent=15 // pred_check_branch
          %465 = sbr.rel (%p463) target = $region28
        $region27: #{xlnet_encoder_forward.1} parent=15 // pred_region
          %s466 = sand.u32 %s103, 1
          %s467 = scalar_lea.sflag [#allocation5], %s466
          %s468 = sand.u32 %s103, 1
          %s469 = smul.addr %s468, 192
          %s470 = scalar_lea.vmem [#allocation4], %s469
          %s472 = ssub.s32 3072, 3072
          %473 = vsyncadd %s467, %s472
          %s474 = smul.addr %s37, 48
          %s475 = smul.addr %s474, 64
          %s476 = scalar_lea.hbm %s2, %s475
          %s477 = sshll.u32 %s470, 4
          %s478 = int_to_ptr.vmem [resolvable:$true] %s477
          %483 = dma.hbm_to_vmem [thread:$0]  %s476, 3072, %s478, %s467, 192, 192, 12
        $region28: #{xlnet_encoder_forward.1} parent=15 // pred_fallthru
          _
        // Predicated region
        $region29: #{xlnet_encoder_forward.1} parent=15 // pred_check
          %p484 = pneg %p139
        $region30: #{xlnet_encoder_forward.1} parent=15 // pred_check_branch
          %486 = sbr.rel (%p484) target = $region32
        $region31: #{xlnet_encoder_forward.1} parent=15 // pred_region
          %p487 = scmp.lt.s32.totalorder %s37, 1
          %s488 = scalar_select %p487, %s37, 1
          %s489 = smul.addr %s488, 3
          %s490 = scalar_lea.vmem %s3, %s489
        $region32: #{xlnet_encoder_forward.1} parent=15 // pred_fallthru
          _
        // Predicated region
        $region33: #{xlnet_encoder_forward.1} parent=15 // pred_check
          %p491 = pneg %p165
        $region34: #{xlnet_encoder_forward.1} parent=15 // pred_check_branch
          %493 = sbr.rel (%p491) target = $region36
        $region35: #{xlnet_encoder_forward.1} parent=15 // pred_region
          %p494 = scmp.lt.s32.totalorder %s37, 1
          %s495 = scalar_select %p494, %s37, 1
          %s496 = smul.addr %s495, 16
          %s497 = smul.addr %s496, 4
          %s498 = scalar_lea.vmem %s4, %s497
        $region36: #{xlnet_encoder_forward.1} parent=15 // pred_fallthru
          _
        // Predicated region
        $region37: #{xlnet_encoder_forward.1} parent=15 // pred_check
          %p499 = pneg %p191
        $region38: #{xlnet_encoder_forward.1} parent=15 // pred_check_branch
          %501 = sbr.rel (%p499) target = $region40
        $region39: #{xlnet_encoder_forward.1} parent=15 // pred_region
          %p502 = scmp.lt.s32.totalorder %s37, 1
          %s503 = scalar_select %p502, %s37, 1
          %s504 = scalar_lea.vmem %s5, %s503
        $region40: #{xlnet_encoder_forward.1} parent=15 // pred_fallthru
          _
        // Predicated region
        $region41: #{xlnet_encoder_forward.1} parent=15 // pred_check
          %p505 = pneg %p217
        $region42: #{xlnet_encoder_forward.1} parent=15 // pred_check_branch
          %507 = sbr.rel (%p505) target = $region44
        $region43: #{xlnet_encoder_forward.1} parent=15 // pred_region
          %p508 = scmp.lt.s32.totalorder %s37, 1
          %s509 = scalar_select %p508, %s37, 1
          %s510 = scalar_lea.vmem %s6, %s509
        $region44: #{xlnet_encoder_forward.1} parent=15 // pred_fallthru
          _
        // Predicated region
        $region45: #{xlnet_encoder_forward.1} parent=15 // pred_check
          %p511 = pneg %p243
        $region46: #{xlnet_encoder_forward.1} parent=15 // pred_check_branch
          %513 = sbr.rel (%p511) target = $region48
        $region47: #{xlnet_encoder_forward.1} parent=15 // pred_region
          %p514 = scmp.lt.s32.totalorder %s37, 1
          %s515 = scalar_select %p514, %s37, 1
          %s516 = scalar_lea.vmem %s7, %s515
        $region48: #{xlnet_encoder_forward.1} parent=15 // pred_fallthru
          _
        // Predicated region
        $region49: #{xlnet_encoder_forward.1} parent=15 // pred_check
          %p517 = pneg %p269
        $region50: #{xlnet_encoder_forward.1} parent=15 // pred_check_branch
          %519 = sbr.rel (%p517) target = $region52
        $region51: #{xlnet_encoder_forward.1} parent=15 // pred_region
          %s520 = sand.u32 %s29, 1
          %s521 = scalar_lea.sflag [#allocation8], %s520
          %s522 = sand.u32 %s259, 1
          %s523 = smul.addr %s522, 128
          %s524 = scalar_lea.vmem [#allocation7], %s523
          %s526 = ssub.s32 2048, 2048
          %527 = vsyncadd %s521, %s526
          %s528 = smul.addr %s37, 32
          %s529 = smul.addr %s528, 64
          %s530 = scalar_lea.hbm %s8, %s529
          %s531 = sshll.u32 %s524, 4
          %s532 = int_to_ptr.vmem [resolvable:$true] %s531
          %537 = dma.hbm_to_vmem [thread:$0]  %s530, 2048, %s532, %s521, 128, 128, 8
        $region52: #{xlnet_encoder_forward.1} parent=15 // pred_fallthru
          _
        // Predicated region
        $region53: #{xlnet_encoder_forward.1} parent=15 // pred_check
          %p538 = pneg %p295
        $region54: #{xlnet_encoder_forward.1} parent=15 // pred_check_branch
          %540 = sbr.rel (%p538) target = $region56
        $region55: #{xlnet_encoder_forward.1} parent=15 // pred_region
          %p541 = scmp.lt.s32.totalorder %s37, 1
          %s542 = scalar_select %p541, %s37, 1
          %s543 = smul.addr %s542, 2
          %s544 = scalar_lea.vmem %s9, %s543
        $region56: #{xlnet_encoder_forward.1} parent=15 // pred_fallthru
          _
        // Predicated region
        $region57: #{xlnet_encoder_forward.1} parent=15 // pred_check
          %p545 = pneg %p321
        $region58: #{xlnet_encoder_forward.1} parent=15 // pred_check_branch
          %547 = sbr.rel (%p545) target = $region60
        $region59: #{xlnet_encoder_forward.1} parent=15 // pred_region
          %s548 = sand.u32 %s29, 1
          %s549 = scalar_lea.sflag [#allocation8], %s548
          %s550 = sand.u32 %s311, 1
          %s551 = smul.addr %s550, 128
          %s552 = scalar_lea.vmem [#allocation9], %s551
          %s554 = ssub.s32 2048, 2048
          %555 = vsyncadd %s549, %s554
          %s556 = smul.addr %s37, 32
          %s557 = smul.addr %s556, 64
          %s558 = scalar_lea.hbm %s10, %s557
          %s559 = sshll.u32 %s552, 4
          %s560 = int_to_ptr.vmem [resolvable:$true] %s559
          %565 = dma.hbm_to_vmem [thread:$0]  %s558, 2048, %s560, %s549, 64, 64, 4
        $region60: #{xlnet_encoder_forward.1} parent=15 // pred_fallthru
          _
        // Predicated region
        $region61: #{xlnet_encoder_forward.1} parent=15 // pred_check
          %p566 = pneg %p347
        $region62: #{xlnet_encoder_forward.1} parent=15 // pred_check_branch
          %568 = sbr.rel (%p566) target = $region64
        $region63: #{xlnet_encoder_forward.1} parent=15 // pred_region
          %p569 = scmp.lt.s32.totalorder %s37, 1
          %s570 = scalar_select %p569, %s37, 1
          %s571 = scalar_lea.vmem %s11, %s570
        $region64: #{xlnet_encoder_forward.1} parent=15 // pred_fallthru
          _
        // Predicated region
        $region65: #{xlnet_encoder_forward.1} parent=15 // pred_check
          %p572 = pneg %p373
        $region66: #{xlnet_encoder_forward.1} parent=15 // pred_check_branch
          %574 = sbr.rel (%p572) target = $region68
        $region67: #{xlnet_encoder_forward.1} parent=15 // pred_region
          %p575 = scmp.lt.s32.totalorder %s37, 1
          %s576 = scalar_select %p575, %s37, 1
          %s577 = scalar_lea.vmem %s12, %s576
        $region68: #{xlnet_encoder_forward.1} parent=15 // pred_fallthru
          _
        // Predicated region
        $region69: #{xlnet_encoder_forward.1} parent=15 // pred_check
          %p578 = pneg %p399
        $region70: #{xlnet_encoder_forward.1} parent=15 // pred_check_branch
          %580 = sbr.rel (%p578) target = $region72
        $region71: #{xlnet_encoder_forward.1} parent=15 // pred_region
          %p581 = scmp.lt.s32.totalorder %s37, 1
          %s582 = scalar_select %p581, %s37, 1
          %s583 = scalar_lea.vmem %s13, %s582
        $region72: #{xlnet_encoder_forward.1} parent=15 // pred_fallthru
          _
      $region16: #{xlnet_encoder_forward.1} parent=5 // pred_fallthru
        _
      %p584 = scmp.le.s32.totalorder 1, %s29
      %p585 = scmp.lt.s32.totalorder %s29, 5
      %p586 = pnand %p584, %p585
      %p587 = pneg %p586
      // Predicated region
      $region73: #{xlnet_encoder_forward.1} parent=5 // pred_check
        _
      $region74: #{xlnet_encoder_forward.1} parent=5 // pred_check_branch
        %589 = sbr.rel (%p586) target = $region76
      $region75: #{xlnet_encoder_forward.1} parent=5 // pred_region
        %s590 = ssub.s32 %s29, 1
        %s591 = sand.u32 %s106, 1
        %s592 = scalar_lea.sflag [#allocation5], %s591
        %s593 = sand.u32 %s106, 1
        %s594 = smul.addr %s593, 192
        %s595 = scalar_lea.vmem [#allocation4], %s594
        // Predicated region
        $region77: #{xlnet_encoder_forward.1} parent=75 // pred_check
          %p596 = pneg %p119
        $region78: #{xlnet_encoder_forward.1} parent=75 // pred_check_branch
          %598 = sbr.rel (%p596) target = $region80
        $region79: #{xlnet_encoder_forward.1} parent=75 // pred_region
          %599 = dma.done %s592, 3072
        $region80: #{xlnet_encoder_forward.1} parent=75 // pred_fallthru
          _
        %s600 = sand.u32 %s34, 1
        %s601 = scalar_lea.sflag [#allocation8], %s600
        %s602 = sand.u32 %s262, 1
        %s603 = smul.addr %s602, 128
        %s604 = scalar_lea.vmem [#allocation7], %s603
        // Predicated region
        $region81: #{xlnet_encoder_forward.1} parent=75 // pred_check
          %p605 = pneg %p275
        $region82: #{xlnet_encoder_forward.1} parent=75 // pred_check_branch
          %607 = sbr.rel (%p605) target = $region84
        $region83: #{xlnet_encoder_forward.1} parent=75 // pred_region
          %608 = dma.done %s601, 2048
        $region84: #{xlnet_encoder_forward.1} parent=75 // pred_fallthru
          _
        %s609 = sand.u32 %s34, 1
        %s610 = scalar_lea.sflag [#allocation8], %s609
        %s611 = sand.u32 %s314, 1
        %s612 = smul.addr %s611, 128
        %s613 = scalar_lea.vmem [#allocation9], %s612
        // Predicated region
        $region85: #{xlnet_encoder_forward.1} parent=75 // pred_check
          %p614 = pneg %p327
        $region86: #{xlnet_encoder_forward.1} parent=75 // pred_check_branch
          %616 = sbr.rel (%p614) target = $region88
        $region87: #{xlnet_encoder_forward.1} parent=75 // pred_region
          %617 = dma.done %s610, 2048
        $region88: #{xlnet_encoder_forward.1} parent=75 // pred_fallthru
          _
        %p618 = scmp.lt.s32.totalorder %s38, 1
        %s619 = scalar_select %p618, %s38, 1
        %s620 = smul.addr %s619, 8
        %s621 = scalar_lea.vmem %s0, %s620
        %p622 = pneg %p67
        %p623 = pneg %p64
        %p624 = scmp.lt.s32.totalorder %s38, 1
        %s625 = scalar_select %p624, %s38, 1
        %s626 = scalar_lea.vmem %s1, %s625
        %p627 = pneg %p93
        %p628 = pneg %p90
        %s629 = sand.u32 %s106, 1
        %s630 = scalar_lea.sflag [#allocation5], %s629
        %s631 = sand.u32 %s106, 1
        %s632 = smul.addr %s631, 192
        %s633 = scalar_lea.vmem [#allocation4], %s632
        %p634 = pneg %p119
        %p635 = pneg %p116
        %p636 = scmp.lt.s32.totalorder %s39, 1
        %s637 = scalar_select %p636, %s39, 1
        %s638 = smul.addr %s637, 3
        %s639 = scalar_lea.vmem %s3, %s638
        %p640 = pneg %p145
        %p641 = pneg %p142
        %p642 = scmp.lt.s32.totalorder %s39, 1
        %s643 = scalar_select %p642, %s39, 1
        %s644 = smul.addr %s643, 16
        %s645 = smul.addr %s644, 4
        %s646 = scalar_lea.vmem %s4, %s645
        %p647 = pneg %p171
        %p648 = pneg %p168
        %p649 = scmp.lt.s32.totalorder %s39, 1
        %s650 = scalar_select %p649, %s39, 1
        %s651 = scalar_lea.vmem %s5, %s650
        %p652 = pneg %p197
        %p653 = pneg %p194
        %p654 = scmp.lt.s32.totalorder %s39, 1
        %s655 = scalar_select %p654, %s39, 1
        %s656 = scalar_lea.vmem %s6, %s655
        %p657 = pneg %p223
        %p658 = pneg %p220
        %p659 = scmp.lt.s32.totalorder %s39, 1
        %s660 = scalar_select %p659, %s39, 1
        %s661 = scalar_lea.vmem %s7, %s660
        %p662 = pneg %p249
        %p663 = pneg %p246
        %s664 = sand.u32 %s34, 1
        %s665 = scalar_lea.sflag [#allocation8], %s664
        %s666 = sand.u32 %s262, 1
        %s667 = smul.addr %s666, 128
        %s668 = scalar_lea.vmem [#allocation7], %s667
        %p669 = pneg %p275
        %p670 = pneg %p272
        %p671 = scmp.lt.s32.totalorder %s39, 1
        %s672 = scalar_select %p671, %s39, 1
        %s673 = smul.addr %s672, 2
        %s674 = scalar_lea.vmem %s9, %s673
        %p675 = pneg %p301
        %p676 = pneg %p298
        %s677 = sand.u32 %s34, 1
        %s678 = scalar_lea.sflag [#allocation8], %s677
        %s679 = sand.u32 %s314, 1
        %s680 = smul.addr %s679, 128
        %s681 = scalar_lea.vmem [#allocation9], %s680
        %p682 = pneg %p327
        %p683 = pneg %p324
        %p684 = scmp.lt.s32.totalorder %s39, 1
        %s685 = scalar_select %p684, %s39, 1
        %s686 = scalar_lea.vmem %s11, %s685
        %p687 = pneg %p353
        %p688 = pneg %p350
        %p689 = scmp.lt.s32.totalorder %s39, 1
        %s690 = scalar_select %p689, %s39, 1
        %s691 = scalar_lea.vmem %s12, %s690
        %p692 = pneg %p379
        %p693 = pneg %p376
        %p694 = scmp.lt.s32.totalorder %s39, 1
        %s695 = scalar_select %p694, %s39, 1
        %s696 = scalar_lea.vmem %s13, %s695
        %p697 = pneg %p405
        %p698 = pneg %p402
        %p699 = pneg %p431
        %p700 = pneg %p428
        %s701 = sand.u32 %s418, 1
        %s702 = scalar_lea.sflag [#allocation6], %s701
        %s703 = sand.u32 %s418, 1
        %s704 = scalar_lea.vmem [#allocation10], %s703
        %p705 = scmp.lt.s32.totalorder %s38, 1
        %s706 = scalar_select %p705, %s38, 1
        %s707 = smul.addr %s706, 8
        %s708 = scalar_lea.vmem %s0, %s707
        %p709 = scmp.lt.s32.totalorder %s38, 1
        %s710 = scalar_select %p709, %s38, 1
        %s711 = scalar_lea.vmem %s1, %s710
        %p712 = scmp.lt.s32.totalorder %s39, 1
        %s713 = scalar_select %p712, %s39, 1
        %s714 = smul.addr %s713, 3
        %s715 = scalar_lea.vmem %s3, %s714
        %p716 = scmp.lt.s32.totalorder %s39, 1
        %s717 = scalar_select %p716, %s39, 1
        %s718 = smul.addr %s717, 16
        %s719 = smul.addr %s718, 4
        %s720 = scalar_lea.vmem %s4, %s719
        %p721 = scmp.lt.s32.totalorder %s39, 1
        %s722 = scalar_select %p721, %s39, 1
        %s723 = scalar_lea.vmem %s5, %s722
        %p724 = scmp.lt.s32.totalorder %s39, 1
        %s725 = scalar_select %p724, %s39, 1
        %s726 = scalar_lea.vmem %s6, %s725
        %p727 = scmp.lt.s32.totalorder %s39, 1
        %s728 = scalar_select %p727, %s39, 1
        %s729 = scalar_lea.vmem %s7, %s728
        %p730 = scmp.lt.s32.totalorder %s39, 1
        %s731 = scalar_select %p730, %s39, 1
        %s732 = smul.addr %s731, 2
        %s733 = scalar_lea.vmem %s9, %s732
        %p734 = scmp.lt.s32.totalorder %s39, 1
        %s735 = scalar_select %p734, %s39, 1
        %s736 = scalar_lea.vmem %s11, %s735
        %p737 = scmp.lt.s32.totalorder %s39, 1
        %s738 = scalar_select %p737, %s39, 1
        %s739 = scalar_lea.vmem %s12, %s738
        %p740 = scmp.lt.s32.totalorder %s39, 1
        %s741 = scalar_select %p740, %s39, 1
        %s742 = scalar_lea.vmem %s13, %s741
        %p744 = scmp.eq.s32.totalorder %s39, 0
        // Predicated region
        $region89: #{xlnet_encoder_forward.1} parent=75 // pred_check
          %p745 = pneg %p744
        $region90: #{xlnet_encoder_forward.1} parent=75 // pred_check_branch
          %747 = sbr.rel (%p745) target = $region92
        $region91: #{xlnet_encoder_forward.1} parent=75 // pred_region
          %v748 = vld [vmem:[%s708] sm:$0xff]
          %749 = vst [vmem:[#allocation2] sm:$0xff] %v748
        $region92: #{xlnet_encoder_forward.1} parent=75 // pred_fallthru
          _
        %v750 = vld [vmem:[#allocation2] sm:$0xff]
        %v751 = vpack.c.bf16 %v750, %v750
        %v752 = vld [vmem:[%s595] sm:$0xff]
        %v753 = vld [vmem:[%s595 + $0x8] sm:$0xf]
        %v754 = vld [vmem:[%s595 + $0xc] sm:$0xff]
        %v755 = vld [vmem:[%s595 + $0x14] sm:$0xf]
        %v756 = vld [vmem:[%s595 + $0x18] sm:$0xff]
        %v757 = vld [vmem:[%s595 + $0x20] sm:$0xf]
        %v758 = vld [vmem:[%s595 + $0x24] sm:$0xff]
        %v759 = vld [vmem:[%s595 + $0x2c] sm:$0xf]
        %v760 = vld [vmem:[%s595 + $0x30] sm:$0xff]
        %v761 = vld [vmem:[%s595 + $0x38] sm:$0xf]
        %v762 = vld [vmem:[%s595 + $0x3c] sm:$0xff]
        %v763 = vld [vmem:[%s595 + $0x44] sm:$0xf]
        %v764 = vld [vmem:[%s595 + $0x48] sm:$0xff]
        %v765 = vld [vmem:[%s595 + $0x50] sm:$0xf]
        %v766 = vld [vmem:[%s595 + $0x54] sm:$0xff]
        %v767 = vld [vmem:[%s595 + $0x5c] sm:$0xf]
        %v768 = vld [vmem:[%s595 + $0x60] sm:$0xff]
        %v769 = vld [vmem:[%s595 + $0x68] sm:$0xf]
        %v770 = vld [vmem:[%s595 + $0x6c] sm:$0xff]
        %v771 = vld [vmem:[%s595 + $0x74] sm:$0xf]
        %v772 = vld [vmem:[%s595 + $0x78] sm:$0xff]
        %v773 = vld [vmem:[%s595 + $0x80] sm:$0xf]
        %v774 = vld [vmem:[%s595 + $0x84] sm:$0xff]
        %v775 = vld [vmem:[%s595 + $0x8c] sm:$0xf]
        %v776 = vld [vmem:[%s595 + $0x90] sm:$0xff]
        %v777 = vld [vmem:[%s595 + $0x98] sm:$0xf]
        %v778 = vld [vmem:[%s595 + $0x9c] sm:$0xff]
        %v779 = vld [vmem:[%s595 + $0xa4] sm:$0xf]
        %v780 = vld [vmem:[%s595 + $0xa8] sm:$0xff]
        %v781 = vld [vmem:[%s595 + $0xb0] sm:$0xf]
        %v782 = vld [vmem:[%s595 + $0xb4] sm:$0xff]
        %v783 = vld [vmem:[%s595 + $0xbc] sm:$0xf]
        %v784 = vld [vmem:[%s715] sm:$0x7]
        %v786 = vlaneseq
        %v787 = vshrl.u32 %v786, 7
        %v788 = vsub.s32 0, %v787
        %v789 = vrot.slane %v784, %v788
        %v790 = vlaneseq
        %v791 = vshrl.u32 %v790, 7
        %v792 = vsub.s32 1, %v791
        %v793 = vrot.slane %v784, %v792
        %v794 = vlaneseq
        %v795 = vshrl.u32 %v794, 7
        %v796 = vsub.s32 2, %v795
        %v797 = vrot.slane %v784, %v796
        %v833 = vunpack.c.l.b16 %v752
        %v834 = vunpack.c.h.b16 %v752
        %v835 = vunpack.c.l.b16 %v753
        %v836 = vunpack.c.l.b16 %v754
        %v837 = vunpack.c.h.b16 %v754
        %v838 = vunpack.c.l.b16 %v755
        %v839 = vunpack.c.l.b16 %v756
        %v840 = vunpack.c.h.b16 %v756
        %v841 = vunpack.c.l.b16 %v757
        %v842 = vunpack.c.l.b16 %v758
        %v843 = vunpack.c.h.b16 %v758
        %v844 = vunpack.c.l.b16 %v759
        %v845 = vunpack.c.l.b16 %v760
        %v846 = vunpack.c.h.b16 %v760
        %v847 = vunpack.c.l.b16 %v761
        %v848 = vunpack.c.l.b16 %v762
        %v849 = vunpack.c.h.b16 %v762
        %v850 = vunpack.c.l.b16 %v763
        %v851 = vunpack.c.l.b16 %v764
        %v852 = vunpack.c.h.b16 %v764
        %v853 = vunpack.c.l.b16 %v765
        %v854 = vunpack.c.l.b16 %v766
        %v855 = vunpack.c.h.b16 %v766
        %v856 = vunpack.c.l.b16 %v767
        %v857 = vunpack.c.l.b16 %v768
        %v858 = vunpack.c.h.b16 %v768
        %v859 = vunpack.c.l.b16 %v769
        %v860 = vunpack.c.l.b16 %v770
        %v861 = vunpack.c.h.b16 %v770
        %v862 = vunpack.c.l.b16 %v771
        %v863 = vunpack.c.l.b16 %v772
        %v864 = vunpack.c.h.b16 %v772
        %v865 = vunpack.c.l.b16 %v773
        %v866 = vunpack.c.l.b16 %v774
        %v867 = vunpack.c.h.b16 %v774
        %v868 = vunpack.c.l.b16 %v775
        %v869 = vunpack.c.l.b16 %v776
        %v870 = vunpack.c.h.b16 %v776
        %v871 = vunpack.c.l.b16 %v777
        %v872 = vunpack.c.l.b16 %v778
        %v873 = vunpack.c.h.b16 %v778
        %v874 = vunpack.c.l.b16 %v779
        %v875 = vunpack.c.l.b16 %v780
        %v876 = vunpack.c.h.b16 %v780
        %v877 = vunpack.c.l.b16 %v781
        %v878 = vunpack.c.l.b16 %v782
        %v879 = vunpack.c.h.b16 %v782
        %v880 = vunpack.c.l.b16 %v783
        %v881 = vpack.c.b16 %v836, %v833
        %v882 = vpack.c.b16 %v837, %v834
        %v883 = vpack.c.b16 %v838, %v835
        %v884 = vpack.c.b16 %v842, %v839
        %v885 = vpack.c.b16 %v843, %v840
        %v886 = vpack.c.b16 %v844, %v841
        %v887 = vpack.c.b16 %v848, %v845
        %v888 = vpack.c.b16 %v849, %v846
        %v889 = vpack.c.b16 %v850, %v847
        %v890 = vpack.c.b16 %v854, %v851
        %v891 = vpack.c.b16 %v855, %v852
        %v892 = vpack.c.b16 %v856, %v853
        %v893 = vpack.c.b16 %v860, %v857
        %v894 = vpack.c.b16 %v861, %v858
        %v895 = vpack.c.b16 %v862, %v859
        %v896 = vpack.c.b16 %v866, %v863
        %v897 = vpack.c.b16 %v867, %v864
        %v898 = vpack.c.b16 %v868, %v865
        %v899 = vpack.c.b16 %v872, %v869
        %v900 = vpack.c.b16 %v873, %v870
        %v901 = vpack.c.b16 %v874, %v871
        %v902 = vpack.c.b16 %v878, %v875
        %v903 = vpack.c.b16 %v879, %v876
        %v904 = vpack.c.b16 %v880, %v877
        %929 = vmatprep.subr.bf16.mxu0 %v903
        %930 = vmatpush1.bf16.msra.mxu0 %v902
        %931 = vmatprep.subr.bf16.mxu0 %v900
        %932 = vmatpush1.bf16.msra.mxu0 %v899
        %933 = vmatprep.subr.bf16.mxu0 %v897
        %934 = vmatpush1.bf16.msra.mxu0 %v896
        %935 = vmatprep.subr.bf16.mxu0 %v894
        %936 = vmatpush1.bf16.msra.mxu0 %v893
        %937 = vmatprep.subr.bf16.mxu0 %v891
        %938 = vmatpush1.bf16.msra.mxu0 %v890
        %939 = vmatprep.subr.bf16.mxu0 %v888
        %940 = vmatpush1.bf16.msra.mxu0 %v887
        %941 = vmatprep.subr.bf16.mxu0 %v885
        %942 = vmatpush1.bf16.msra.mxu0 %v884
        %943 = vmatprep.subr.bf16.mxu0 %v882
        %944 = vmatpush1.bf16.msra.mxu0 %v881
        %945 = vmatprep.subr.bf16.mxu0 0
        %946 = vmatpush2.bf16.msra.mxu0 0
        %947 = vmatprep.subr.bf16.mxu0 0
        %948 = vmatpush2.bf16.msra.mxu0 0
        %949 = vmatprep.subr.bf16.mxu0 0
        %950 = vmatpush2.bf16.msra.mxu0 0
        %951 = vmatprep.subr.bf16.mxu0 0
        %952 = vmatpush2.bf16.msra.mxu0 0
        %953 = vmatprep.subr.bf16.mxu0 0
        %954 = vmatpush2.bf16.msra.mxu0 0
        %955 = vmatprep.subr.bf16.mxu0 0
        %956 = vmatpush2.bf16.msra.mxu0 0
        %957 = vmatprep.subr.bf16.mxu0 0
        %958 = vmatpush2.bf16.msra.mxu0 0
        %959 = vmatprep.subr.bf16.mxu0 0
        %960 = vmatpush2.bf16.msra.mxu0 0
        %961 = vmatprep.mubr.bf16.mxu0 0
        %962 = vmatmul.mubr.bf16.gmra.mxu0 %v751
        %v963 = vpop.f32.mrf.mxu0
        %v964 = vadd.f32 %v789, %v963
        %v965 = vpop.f32.mrf.mxu0
        %v966 = vadd.f32 %v793, %v965
        %v967 = vpop.f32.mrf.mxu0
        %v968 = vpop.f32.mrf.mxu0
        %969 = vdwg.mxu0
        %970 = vmatprep.subr.bf16.mxu0 0
        %971 = vmatpush1.bf16.msra.mxu0 %v904
        %972 = vmatprep.subr.bf16.mxu0 0
        %973 = vmatpush1.bf16.msra.mxu0 %v901
        %974 = vmatprep.subr.bf16.mxu0 0
        %975 = vmatpush1.bf16.msra.mxu0 %v898
        %976 = vmatprep.subr.bf16.mxu0 0
        %977 = vmatpush1.bf16.msra.mxu0 %v895
        %978 = vmatprep.subr.bf16.mxu0 0
        %979 = vmatpush1.bf16.msra.mxu0 %v892
        %980 = vmatprep.subr.bf16.mxu0 0
        %981 = vmatpush1.bf16.msra.mxu0 %v889
        %982 = vmatprep.subr.bf16.mxu0 0
        %983 = vmatpush1.bf16.msra.mxu0 %v886
        %984 = vmatprep.subr.bf16.mxu0 0
        %985 = vmatpush1.bf16.msra.mxu0 %v883
        %986 = vmatprep.subr.bf16.mxu0 0
        %987 = vmatpush2.bf16.msra.mxu0 0
        %988 = vmatprep.subr.bf16.mxu0 0
        %989 = vmatpush2.bf16.msra.mxu0 0
        %990 = vmatprep.subr.bf16.mxu0 0
        %991 = vmatpush2.bf16.msra.mxu0 0
        %992 = vmatprep.subr.bf16.mxu0 0
        %993 = vmatpush2.bf16.msra.mxu0 0
        %994 = vmatprep.subr.bf16.mxu0 0
        %995 = vmatpush2.bf16.msra.mxu0 0
        %996 = vmatprep.subr.bf16.mxu0 0
        %997 = vmatpush2.bf16.msra.mxu0 0
        %998 = vmatprep.subr.bf16.mxu0 0
        %999 = vmatpush2.bf16.msra.mxu0 0
        %1000 = vmatprep.subr.bf16.mxu0 0
        %1001 = vmatpush2.bf16.msra.mxu0 0
        %1002 = vmatprep.mubr.bf16.mxu0 0
        %1003 = vmatmul.mubr.bf16.gmra.mxu0 %v751
        %v1004 = vpop.f32.mrf.mxu0
        %v1005 = vadd.f32 %v797, %v1004
        %v1006 = vpop.f32.mrf.mxu0
        %v1007 = vpop.f32.mrf.mxu0
        %v1008 = vpop.f32.mrf.mxu0
        %1009 = vdwg.mxu0
        %v1010 = vmul.f32 %v964, 0.17677669
        %v1011 = vpack.c.bf16 %v1010, %v1010
        %v1012 = vpack.c.bf16 %v966, %v966
        %v1013 = vpack.c.bf16 %v1005, %v1005
        %1015 = vrot.lane.b32.xlu0 %v1011, 96
        %v1016 = vpop.permute.xlu0 %1015
        %1017 = vrot.lane.b32.xlu0 %v1011, 64
        %v1018 = vpop.permute.xlu0 %1017
        %1019 = vrot.lane.b32.xlu0 %v1011, 32
        %v1020 = vpop.permute.xlu0 %1019
        %1022 = vrot.lane.b32.xlu0 %v1012, 96
        %v1023 = vpop.permute.xlu0 %1022
        %1024 = vrot.lane.b32.xlu0 %v1012, 64
        %v1025 = vpop.permute.xlu0 %1024
        %1026 = vrot.lane.b32.xlu0 %v1012, 32
        %v1027 = vpop.permute.xlu0 %1026
        %1029 = vrot.lane.b32.xlu0 %v1013, 96
        %v1030 = vpop.permute.xlu0 %1029
        %1031 = vrot.lane.b32.xlu0 %v1013, 64
        %v1032 = vpop.permute.xlu0 %1031
        %1033 = vrot.lane.b32.xlu0 %v1013, 32
        %v1034 = vpop.permute.xlu0 %1033
        %v1035 = vld [vmem:[%s711] sm:$0x1]
        %v1037 = vlaneseq
        %v1038 = vshrl.u32 %v1037, 7
        %v1039 = vsub.s32 0, %v1038
        %v1040 = vrot.slane %v1035, %v1039
        %vm1042 = vcmask 261120
        %v1044 = vsel %vm1042, %v1011, 0
        %v1047 = vsel %vm1042, %v1012, 0
        %1049 = vmatprep.subr.bf16.mxu0 0
        %1050 = vmatpush1.bf16.xpose.msra.mxu0 0
        %1051 = vmatprep.subr.bf16.mxu0 0
        %1052 = vmatpush1.bf16.xpose.msra.mxu0 0
        %1053 = vmatprep.subr.bf16.mxu0 0
        %1054 = vmatpush1.bf16.xpose.msra.mxu0 0
        %1055 = vmatprep.subr.bf16.mxu0 0
        %1056 = vmatpush1.bf16.xpose.msra.mxu0 0
        %1057 = vmatprep.subr.bf16.mxu0 0
        %1058 = vmatpush1.bf16.xpose.msra.mxu0 0
        %1059 = vmatprep.subr.bf16.mxu0 0
        %1060 = vmatpush1.bf16.xpose.msra.mxu0 0
        %1061 = vmatprep.subr.bf16.mxu0 0
        %1062 = vmatpush1.bf16.xpose.msra.mxu0 0
        %1063 = vmatprep.subr.bf16.mxu0 0
        %1064 = vmatpush1.bf16.xpose.msra.mxu0 %v1047
        %1065 = vmatprep.subr.bf16.mxu0 0
        %1066 = vmatpush2.bf16.xpose.msra.mxu0 0
        %1067 = vmatprep.subr.bf16.mxu0 0
        %1068 = vmatpush2.bf16.xpose.msra.mxu0 0
        %1069 = vmatprep.subr.bf16.mxu0 0
        %1070 = vmatpush2.bf16.xpose.msra.mxu0 0
        %1071 = vmatprep.subr.bf16.mxu0 0
        %1072 = vmatpush2.bf16.xpose.msra.mxu0 0
        %1073 = vmatprep.subr.bf16.mxu0 0
        %1074 = vmatpush2.bf16.xpose.msra.mxu0 0
        %1075 = vmatprep.subr.bf16.mxu0 0
        %1076 = vmatpush2.bf16.xpose.msra.mxu0 0
        %1077 = vmatprep.subr.bf16.mxu0 0
        %1078 = vmatpush2.bf16.xpose.msra.mxu0 0
        %1079 = vmatprep.subr.bf16.mxu0 0
        %1080 = vmatpush2.bf16.xpose.msra.mxu0 0
        %1081 = vmatprep.mubr.bf16.mxu0 0
        %1082 = vmatmul.mubr.bf16.gmra.mxu0 %v1044
        %v1083 = vpop.f32.mrf.mxu0
        %v1084 = vadd.f32 %v1040, %v1083
        %v1085 = vpop.f32.mrf.mxu0
        %v1086 = vpop.f32.mrf.mxu0
        %v1087 = vpop.f32.mrf.mxu0
        %1088 = vdwg.mxu0
        %v1090 = vsel %vm1042, %v1016, 0
        %v1093 = vsel %vm1042, %v1023, 0
        %1095 = vmatprep.subr.bf16.mxu0 0
        %1096 = vmatpush1.bf16.xpose.msra.mxu0 0
        %1097 = vmatprep.subr.bf16.mxu0 0
        %1098 = vmatpush1.bf16.xpose.msra.mxu0 0
        %1099 = vmatprep.subr.bf16.mxu0 0
        %1100 = vmatpush1.bf16.xpose.msra.mxu0 0
        %1101 = vmatprep.subr.bf16.mxu0 0
        %1102 = vmatpush1.bf16.xpose.msra.mxu0 0
        %1103 = vmatprep.subr.bf16.mxu0 0
        %1104 = vmatpush1.bf16.xpose.msra.mxu0 0
        %1105 = vmatprep.subr.bf16.mxu0 0
        %1106 = vmatpush1.bf16.xpose.msra.mxu0 0
        %1107 = vmatprep.subr.bf16.mxu0 0
        %1108 = vmatpush1.bf16.xpose.msra.mxu0 0
        %1109 = vmatprep.subr.bf16.mxu0 0
        %1110 = vmatpush1.bf16.xpose.msra.mxu0 %v1093
        %1111 = vmatprep.subr.bf16.mxu0 0
        %1112 = vmatpush2.bf16.xpose.msra.mxu0 0
        %1113 = vmatprep.subr.bf16.mxu0 0
        %1114 = vmatpush2.bf16.xpose.msra.mxu0 0
        %1115 = vmatprep.subr.bf16.mxu0 0
        %1116 = vmatpush2.bf16.xpose.msra.mxu0 0
        %1117 = vmatprep.subr.bf16.mxu0 0
        %1118 = vmatpush2.bf16.xpose.msra.mxu0 0
        %1119 = vmatprep.subr.bf16.mxu0 0
        %1120 = vmatpush2.bf16.xpose.msra.mxu0 0
        %1121 = vmatprep.subr.bf16.mxu0 0
        %1122 = vmatpush2.bf16.xpose.msra.mxu0 0
        %1123 = vmatprep.subr.bf16.mxu0 0
        %1124 = vmatpush2.bf16.xpose.msra.mxu0 0
        %1125 = vmatprep.subr.bf16.mxu0 0
        %1126 = vmatpush2.bf16.xpose.msra.mxu0 0
        %1127 = vmatprep.mubr.bf16.mxu0 0
        %1128 = vmatmul.mubr.bf16.gmra.mxu0 %v1090
        %v1129 = vpop.f32.mrf.mxu0
        %v1130 = vadd.f32 %v1040, %v1129
        %v1131 = vpop.f32.mrf.mxu0
        %v1132 = vpop.f32.mrf.mxu0
        %v1133 = vpop.f32.mrf.mxu0
        %1134 = vdwg.mxu0
        %v1136 = vsel %vm1042, %v1018, 0
        %v1139 = vsel %vm1042, %v1025, 0
        %1141 = vmatprep.subr.bf16.mxu0 0
        %1142 = vmatpush1.bf16.xpose.msra.mxu0 0
        %1143 = vmatprep.subr.bf16.mxu0 0
        %1144 = vmatpush1.bf16.xpose.msra.mxu0 0
        %1145 = vmatprep.subr.bf16.mxu0 0
        %1146 = vmatpush1.bf16.xpose.msra.mxu0 0
        %1147 = vmatprep.subr.bf16.mxu0 0
        %1148 = vmatpush1.bf16.xpose.msra.mxu0 0
        %1149 = vmatprep.subr.bf16.mxu0 0
        %1150 = vmatpush1.bf16.xpose.msra.mxu0 0
        %1151 = vmatprep.subr.bf16.mxu0 0
        %1152 = vmatpush1.bf16.xpose.msra.mxu0 0
        %1153 = vmatprep.subr.bf16.mxu0 0
        %1154 = vmatpush1.bf16.xpose.msra.mxu0 0
        %1155 = vmatprep.subr.bf16.mxu0 0
        %1156 = vmatpush1.bf16.xpose.msra.mxu0 %v1139
        %1157 = vmatprep.subr.bf16.mxu0 0
        %1158 = vmatpush2.bf16.xpose.msra.mxu0 0
        %1159 = vmatprep.subr.bf16.mxu0 0
        %1160 = vmatpush2.bf16.xpose.msra.mxu0 0
        %1161 = vmatprep.subr.bf16.mxu0 0
        %1162 = vmatpush2.bf16.xpose.msra.mxu0 0
        %1163 = vmatprep.subr.bf16.mxu0 0
        %1164 = vmatpush2.bf16.xpose.msra.mxu0 0
        %1165 = vmatprep.subr.bf16.mxu0 0
        %1166 = vmatpush2.bf16.xpose.msra.mxu0 0
        %1167 = vmatprep.subr.bf16.mxu0 0
        %1168 = vmatpush2.bf16.xpose.msra.mxu0 0
        %1169 = vmatprep.subr.bf16.mxu0 0
        %1170 = vmatpush2.bf16.xpose.msra.mxu0 0
        %1171 = vmatprep.subr.bf16.mxu0 0
        %1172 = vmatpush2.bf16.xpose.msra.mxu0 0
        %1173 = vmatprep.mubr.bf16.mxu0 0
        %1174 = vmatmul.mubr.bf16.gmra.mxu0 %v1136
        %v1175 = vpop.f32.mrf.mxu0
        %v1176 = vadd.f32 %v1040, %v1175
        %v1177 = vpop.f32.mrf.mxu0
        %v1178 = vpop.f32.mrf.mxu0
        %v1179 = vpop.f32.mrf.mxu0
        %1180 = vdwg.mxu0
        %v1182 = vsel %vm1042, %v1020, 0
        %v1185 = vsel %vm1042, %v1027, 0
        %1187 = vmatprep.subr.bf16.mxu0 0
        %1188 = vmatpush1.bf16.xpose.msra.mxu0 0
        %1189 = vmatprep.subr.bf16.mxu0 0
        %1190 = vmatpush1.bf16.xpose.msra.mxu0 0
        %1191 = vmatprep.subr.bf16.mxu0 0
        %1192 = vmatpush1.bf16.xpose.msra.mxu0 0
        %1193 = vmatprep.subr.bf16.mxu0 0
        %1194 = vmatpush1.bf16.xpose.msra.mxu0 0
        %1195 = vmatprep.subr.bf16.mxu0 0
        %1196 = vmatpush1.bf16.xpose.msra.mxu0 0
        %1197 = vmatprep.subr.bf16.mxu0 0
        %1198 = vmatpush1.bf16.xpose.msra.mxu0 0
        %1199 = vmatprep.subr.bf16.mxu0 0
        %1200 = vmatpush1.bf16.xpose.msra.mxu0 0
        %1201 = vmatprep.subr.bf16.mxu0 0
        %1202 = vmatpush1.bf16.xpose.msra.mxu0 %v1185
        %1203 = vmatprep.subr.bf16.mxu0 0
        %1204 = vmatpush2.bf16.xpose.msra.mxu0 0
        %1205 = vmatprep.subr.bf16.mxu0 0
        %1206 = vmatpush2.bf16.xpose.msra.mxu0 0
        %1207 = vmatprep.subr.bf16.mxu0 0
        %1208 = vmatpush2.bf16.xpose.msra.mxu0 0
        %1209 = vmatprep.subr.bf16.mxu0 0
        %1210 = vmatpush2.bf16.xpose.msra.mxu0 0
        %1211 = vmatprep.subr.bf16.mxu0 0
        %1212 = vmatpush2.bf16.xpose.msra.mxu0 0
        %1213 = vmatprep.subr.bf16.mxu0 0
        %1214 = vmatpush2.bf16.xpose.msra.mxu0 0
        %1215 = vmatprep.subr.bf16.mxu0 0
        %1216 = vmatpush2.bf16.xpose.msra.mxu0 0
        %1217 = vmatprep.subr.bf16.mxu0 0
        %1218 = vmatpush2.bf16.xpose.msra.mxu0 0
        %1219 = vmatprep.mubr.bf16.mxu0 0
        %1220 = vmatmul.mubr.bf16.gmra.mxu0 %v1182
        %v1221 = vpop.f32.mrf.mxu0
        %v1222 = vadd.f32 %v1040, %v1221
        %v1223 = vpop.f32.mrf.mxu0
        %v1224 = vpop.f32.mrf.mxu0
        %v1225 = vpop.f32.mrf.mxu0
        %1226 = vdwg.mxu0
        %vm1227 = vcmask 64512
        %v1228 = vsel %vm1227, %v1084, -inf
        %1229 = vmax.xlane.f32.xlu0 %v1228
        %v1230 = vpop.xlane.xlu0 %1229
        %v1231 = vsel %vm1227, %v1130, -inf
        %1232 = vmax.xlane.f32.xlu0 %v1231
        %v1233 = vpop.xlane.xlu0 %1232
        %v1234 = vsel %vm1227, %v1176, -inf
        %1235 = vmax.xlane.f32.xlu0 %v1234
        %v1236 = vpop.xlane.xlu0 %1235
        %v1237 = vsel %vm1227, %v1222, -inf
        %1238 = vmax.xlane.f32.xlu0 %v1237
        %v1239 = vpop.xlane.xlu0 %1238
        %v1240 = vsub.f32 %v1084, %v1230
        %v1241 = vsub.f32 %v1130, %v1233
        %v1242 = vsub.f32 %v1176, %v1236
        %v1243 = vsub.f32 %v1222, %v1239
        %v1244 = vmul.f32 %v1240, 1.442695
        %v1245 = vpow.pop %v1244
        %v1246 = vmul.f32 %v1241, 1.442695
        %v1247 = vpow.pop %v1246
        %v1248 = vmul.f32 %v1242, 1.442695
        %v1249 = vpow.pop %v1248
        %v1250 = vmul.f32 %v1243, 1.442695
        %v1251 = vpow.pop %v1250
        %v1252 = vsel %vm1227, %v1245, 0.0
        %1253 = vadd.xlane.f32.xlu0 %v1252
        %v1254 = vpop.xlane.xlu0 %1253
        %v1255 = vsel %vm1227, %v1247, 0.0
        %1256 = vadd.xlane.f32.xlu0 %v1255
        %v1257 = vpop.xlane.xlu0 %1256
        %v1258 = vsel %vm1227, %v1249, 0.0
        %1259 = vadd.xlane.f32.xlu0 %v1258
        %v1260 = vpop.xlane.xlu0 %1259
        %v1261 = vsel %vm1227, %v1251, 0.0
        %1262 = vadd.xlane.f32.xlu0 %v1261
        %v1263 = vpop.xlane.xlu0 %1262
        %v1264 = vrcp.pop %v1254
        %v1265 = vrcp.pop %v1257
        %v1266 = vrcp.pop %v1260
        %v1267 = vrcp.pop %v1263
        %v1268 = vmul.f32 %v1245, %v1264
        %v1269 = vmul.f32 %v1247, %v1265
        %v1270 = vmul.f32 %v1249, %v1266
        %v1271 = vmul.f32 %v1251, %v1267
        %v1272 = vpack.c.bf16 %v1268, %v1268
        %v1273 = vpack.c.bf16 %v1269, %v1269
        %v1274 = vpack.c.bf16 %v1270, %v1270
        %v1275 = vpack.c.bf16 %v1271, %v1271
        %v1277 = vsel %vm1227, %v1272, 0
        %vm1279 = vcmask 1043456
        %v1281 = vsel %vm1279, %v1013, 0
        %1283 = vmatprep.subr.bf16.mxu0 0
        %1284 = vmatpush1.bf16.msra.mxu0 0
        %1285 = vmatprep.subr.bf16.mxu0 0
        %1286 = vmatpush1.bf16.msra.mxu0 0
        %1287 = vmatprep.subr.bf16.mxu0 0
        %1288 = vmatpush1.bf16.msra.mxu0 0
        %1289 = vmatprep.subr.bf16.mxu0 0
        %1290 = vmatpush1.bf16.msra.mxu0 0
        %1291 = vmatprep.subr.bf16.mxu0 0
        %1292 = vmatpush1.bf16.msra.mxu0 0
        %1293 = vmatprep.subr.bf16.mxu0 0
        %1294 = vmatpush1.bf16.msra.mxu0 0
        %1295 = vmatprep.subr.bf16.mxu0 0
        %1296 = vmatpush1.bf16.msra.mxu0 0
        %1297 = vmatprep.subr.bf16.mxu0 0
        %1298 = vmatpush1.bf16.msra.mxu0 %v1281
        %1299 = vmatprep.subr.bf16.mxu0 0
        %1300 = vmatpush2.bf16.msra.mxu0 0
        %1301 = vmatprep.subr.bf16.mxu0 0
        %1302 = vmatpush2.bf16.msra.mxu0 0
        %1303 = vmatprep.subr.bf16.mxu0 0
        %1304 = vmatpush2.bf16.msra.mxu0 0
        %1305 = vmatprep.subr.bf16.mxu0 0
        %1306 = vmatpush2.bf16.msra.mxu0 0
        %1307 = vmatprep.subr.bf16.mxu0 0
        %1308 = vmatpush2.bf16.msra.mxu0 0
        %1309 = vmatprep.subr.bf16.mxu0 0
        %1310 = vmatpush2.bf16.msra.mxu0 0
        %1311 = vmatprep.subr.bf16.mxu0 0
        %1312 = vmatpush2.bf16.msra.mxu0 0
        %1313 = vmatprep.subr.bf16.mxu0 0
        %1314 = vmatpush2.bf16.msra.mxu0 0
        %1315 = vmatprep.mubr.bf16.mxu0 0
        %1316 = vmatmul.mubr.bf16.gmra.mxu0 %v1277
        %v1317 = vpop.f32.mrf.mxu0
        %v1318 = vadd.f32 0.0, %v1317
        %v1319 = vpop.f32.mrf.mxu0
        %v1320 = vpop.f32.mrf.mxu0
        %v1321 = vpop.f32.mrf.mxu0
        %1322 = vdwg.mxu0
        %v1324 = vsel %vm1227, %v1273, 0
        %v1327 = vsel %vm1279, %v1030, 0
        %1329 = vmatprep.subr.bf16.mxu0 0
        %1330 = vmatpush1.bf16.msra.mxu0 0
        %1331 = vmatprep.subr.bf16.mxu0 0
        %1332 = vmatpush1.bf16.msra.mxu0 0
        %1333 = vmatprep.subr.bf16.mxu0 0
        %1334 = vmatpush1.bf16.msra.mxu0 0
        %1335 = vmatprep.subr.bf16.mxu0 0
        %1336 = vmatpush1.bf16.msra.mxu0 0
        %1337 = vmatprep.subr.bf16.mxu0 0
        %1338 = vmatpush1.bf16.msra.mxu0 0
        %1339 = vmatprep.subr.bf16.mxu0 0
        %1340 = vmatpush1.bf16.msra.mxu0 0
        %1341 = vmatprep.subr.bf16.mxu0 0
        %1342 = vmatpush1.bf16.msra.mxu0 0
        %1343 = vmatprep.subr.bf16.mxu0 0
        %1344 = vmatpush1.bf16.msra.mxu0 %v1327
        %1345 = vmatprep.subr.bf16.mxu0 0
        %1346 = vmatpush2.bf16.msra.mxu0 0
        %1347 = vmatprep.subr.bf16.mxu0 0
        %1348 = vmatpush2.bf16.msra.mxu0 0
        %1349 = vmatprep.subr.bf16.mxu0 0
        %1350 = vmatpush2.bf16.msra.mxu0 0
        %1351 = vmatprep.subr.bf16.mxu0 0
        %1352 = vmatpush2.bf16.msra.mxu0 0
        %1353 = vmatprep.subr.bf16.mxu0 0
        %1354 = vmatpush2.bf16.msra.mxu0 0
        %1355 = vmatprep.subr.bf16.mxu0 0
        %1356 = vmatpush2.bf16.msra.mxu0 0
        %1357 = vmatprep.subr.bf16.mxu0 0
        %1358 = vmatpush2.bf16.msra.mxu0 0
        %1359 = vmatprep.subr.bf16.mxu0 0
        %1360 = vmatpush2.bf16.msra.mxu0 0
        %1361 = vmatprep.mubr.bf16.mxu0 0
        %1362 = vmatmul.mubr.bf16.gmra.mxu0 %v1324
        %v1363 = vpop.f32.mrf.mxu0
        %v1364 = vadd.f32 0.0, %v1363
        %v1365 = vpop.f32.mrf.mxu0
        %v1366 = vpop.f32.mrf.mxu0
        %v1367 = vpop.f32.mrf.mxu0
        %1368 = vdwg.mxu0
        %v1370 = vsel %vm1227, %v1274, 0
        %v1373 = vsel %vm1279, %v1032, 0
        %1375 = vmatprep.subr.bf16.mxu0 0
        %1376 = vmatpush1.bf16.msra.mxu0 0
        %1377 = vmatprep.subr.bf16.mxu0 0
        %1378 = vmatpush1.bf16.msra.mxu0 0
        %1379 = vmatprep.subr.bf16.mxu0 0
        %1380 = vmatpush1.bf16.msra.mxu0 0
        %1381 = vmatprep.subr.bf16.mxu0 0
        %1382 = vmatpush1.bf16.msra.mxu0 0
        %1383 = vmatprep.subr.bf16.mxu0 0
        %1384 = vmatpush1.bf16.msra.mxu0 0
        %1385 = vmatprep.subr.bf16.mxu0 0
        %1386 = vmatpush1.bf16.msra.mxu0 0
        %1387 = vmatprep.subr.bf16.mxu0 0
        %1388 = vmatpush1.bf16.msra.mxu0 0
        %1389 = vmatprep.subr.bf16.mxu0 0
        %1390 = vmatpush1.bf16.msra.mxu0 %v1373
        %1391 = vmatprep.subr.bf16.mxu0 0
        %1392 = vmatpush2.bf16.msra.mxu0 0
        %1393 = vmatprep.subr.bf16.mxu0 0
        %1394 = vmatpush2.bf16.msra.mxu0 0
        %1395 = vmatprep.subr.bf16.mxu0 0
        %1396 = vmatpush2.bf16.msra.mxu0 0
        %1397 = vmatprep.subr.bf16.mxu0 0
        %1398 = vmatpush2.bf16.msra.mxu0 0
        %1399 = vmatprep.subr.bf16.mxu0 0
        %1400 = vmatpush2.bf16.msra.mxu0 0
        %1401 = vmatprep.subr.bf16.mxu0 0
        %1402 = vmatpush2.bf16.msra.mxu0 0
        %1403 = vmatprep.subr.bf16.mxu0 0
        %1404 = vmatpush2.bf16.msra.mxu0 0
        %1405 = vmatprep.subr.bf16.mxu0 0
        %1406 = vmatpush2.bf16.msra.mxu0 0
        %1407 = vmatprep.mubr.bf16.mxu0 0
        %1408 = vmatmul.mubr.bf16.gmra.mxu0 %v1370
        %v1409 = vpop.f32.mrf.mxu0
        %v1410 = vadd.f32 0.0, %v1409
        %v1411 = vpop.f32.mrf.mxu0
        %v1412 = vpop.f32.mrf.mxu0
        %v1413 = vpop.f32.mrf.mxu0
        %1414 = vdwg.mxu0
        %v1416 = vsel %vm1227, %v1275, 0
        %v1419 = vsel %vm1279, %v1034, 0
        %1421 = vmatprep.subr.bf16.mxu0 0
        %1422 = vmatpush1.bf16.msra.mxu0 0
        %1423 = vmatprep.subr.bf16.mxu0 0
        %1424 = vmatpush1.bf16.msra.mxu0 0
        %1425 = vmatprep.subr.bf16.mxu0 0
        %1426 = vmatpush1.bf16.msra.mxu0 0
        %1427 = vmatprep.subr.bf16.mxu0 0
        %1428 = vmatpush1.bf16.msra.mxu0 0
        %1429 = vmatprep.subr.bf16.mxu0 0
        %1430 = vmatpush1.bf16.msra.mxu0 0
        %1431 = vmatprep.subr.bf16.mxu0 0
        %1432 = vmatpush1.bf16.msra.mxu0 0
        %1433 = vmatprep.subr.bf16.mxu0 0
        %1434 = vmatpush1.bf16.msra.mxu0 0
        %1435 = vmatprep.subr.bf16.mxu0 0
        %1436 = vmatpush1.bf16.msra.mxu0 %v1419
        %1437 = vmatprep.subr.bf16.mxu0 0
        %1438 = vmatpush2.bf16.msra.mxu0 0
        %1439 = vmatprep.subr.bf16.mxu0 0
        %1440 = vmatpush2.bf16.msra.mxu0 0
        %1441 = vmatprep.subr.bf16.mxu0 0
        %1442 = vmatpush2.bf16.msra.mxu0 0
        %1443 = vmatprep.subr.bf16.mxu0 0
        %1444 = vmatpush2.bf16.msra.mxu0 0
        %1445 = vmatprep.subr.bf16.mxu0 0
        %1446 = vmatpush2.bf16.msra.mxu0 0
        %1447 = vmatprep.subr.bf16.mxu0 0
        %1448 = vmatpush2.bf16.msra.mxu0 0
        %1449 = vmatprep.subr.bf16.mxu0 0
        %1450 = vmatpush2.bf16.msra.mxu0 0
        %1451 = vmatprep.subr.bf16.mxu0 0
        %1452 = vmatpush2.bf16.msra.mxu0 0
        %1453 = vmatprep.mubr.bf16.mxu0 0
        %1454 = vmatmul.mubr.bf16.gmra.mxu0 %v1416
        %v1455 = vpop.f32.mrf.mxu0
        %v1456 = vadd.f32 0.0, %v1455
        %v1457 = vpop.f32.mrf.mxu0
        %v1458 = vpop.f32.mrf.mxu0
        %v1459 = vpop.f32.mrf.mxu0
        %1460 = vdwg.mxu0
        %1461 = vst.msk [vmem:[#allocation3] sm:$0xff] %vm1042, %v1318
        %1463 = vrot.lane.b32.xlu0 %v1364, 32
        %v1464 = vpop.permute.xlu0 %1463
        %vm1466 = vcmask 523520
        %1467 = vst.msk [vmem:[#allocation3] sm:$0xff] %vm1466, %v1464
        %1469 = vrot.lane.b32.xlu0 %v1410, 64
        %v1470 = vpop.permute.xlu0 %1469
        %vm1472 = vcmask 785920
        %1473 = vst.msk [vmem:[#allocation3] sm:$0xff] %vm1472, %v1470
        %1475 = vrot.lane.b32.xlu0 %v1456, 96
        %v1476 = vpop.permute.xlu0 %1475
        %vm1478 = vcmask 1048320
        %1479 = vst.msk [vmem:[#allocation3] sm:$0xff] %vm1478, %v1476
        %v1480 = vld [vmem:[#allocation3] sm:$0xff]
        %v1481 = vpack.c.bf16 %v1480, %v1480
        %v1482 = vld [vmem:[%s720] sm:$0xf]
        %v1483 = vld [vmem:[%s720 + $0x4] sm:$0xf]
        %v1484 = vld [vmem:[%s720 + $0x8] sm:$0xf]
        %v1485 = vld [vmem:[%s720 + $0xc] sm:$0xf]
        %v1486 = vld [vmem:[%s720 + $0x10] sm:$0xf]
        %v1487 = vld [vmem:[%s720 + $0x14] sm:$0xf]
        %v1488 = vld [vmem:[%s720 + $0x18] sm:$0xf]
        %v1489 = vld [vmem:[%s720 + $0x1c] sm:$0xf]
        %v1490 = vld [vmem:[%s720 + $0x20] sm:$0xf]
        %v1491 = vld [vmem:[%s720 + $0x24] sm:$0xf]
        %v1492 = vld [vmem:[%s720 + $0x28] sm:$0xf]
        %v1493 = vld [vmem:[%s720 + $0x2c] sm:$0xf]
        %v1494 = vld [vmem:[%s720 + $0x30] sm:$0xf]
        %v1495 = vld [vmem:[%s720 + $0x34] sm:$0xf]
        %v1496 = vld [vmem:[%s720 + $0x38] sm:$0xf]
        %v1497 = vld [vmem:[%s720 + $0x3c] sm:$0xf]
        %v1498 = vld [vmem:[%s723] sm:$0x1]
        %v1500 = vlaneseq
        %v1501 = vshrl.u32 %v1500, 7
        %v1502 = vsub.s32 0, %v1501
        %v1503 = vrot.slane %v1498, %v1502
        %v1521 = vunpack.c.l.b16 %v1482
        %v1522 = vunpack.c.l.b16 %v1483
        %v1523 = vunpack.c.l.b16 %v1484
        %v1524 = vunpack.c.l.b16 %v1485
        %v1525 = vunpack.c.l.b16 %v1486
        %v1526 = vunpack.c.l.b16 %v1487
        %v1527 = vunpack.c.l.b16 %v1488
        %v1528 = vunpack.c.l.b16 %v1489
        %v1529 = vunpack.c.l.b16 %v1490
        %v1530 = vunpack.c.l.b16 %v1491
        %v1531 = vunpack.c.l.b16 %v1492
        %v1532 = vunpack.c.l.b16 %v1493
        %v1533 = vunpack.c.l.b16 %v1494
        %v1534 = vunpack.c.l.b16 %v1495
        %v1535 = vunpack.c.l.b16 %v1496
        %v1536 = vunpack.c.l.b16 %v1497
        %v1537 = vpack.c.b16 %v1522, %v1521
        %v1538 = vpack.c.b16 %v1524, %v1523
        %v1539 = vpack.c.b16 %v1526, %v1525
        %v1540 = vpack.c.b16 %v1528, %v1527
        %v1541 = vpack.c.b16 %v1530, %v1529
        %v1542 = vpack.c.b16 %v1532, %v1531
        %v1543 = vpack.c.b16 %v1534, %v1533
        %v1544 = vpack.c.b16 %v1536, %v1535
        %1553 = vmatprep.subr.bf16.mxu0 0
        %1554 = vmatpush1.bf16.msra.mxu0 %v1544
        %1555 = vmatprep.subr.bf16.mxu0 0
        %1556 = vmatpush1.bf16.msra.mxu0 %v1543
        %1557 = vmatprep.subr.bf16.mxu0 0
        %1558 = vmatpush1.bf16.msra.mxu0 %v1542
        %1559 = vmatprep.subr.bf16.mxu0 0
        %1560 = vmatpush1.bf16.msra.mxu0 %v1541
        %1561 = vmatprep.subr.bf16.mxu0 0
        %1562 = vmatpush1.bf16.msra.mxu0 %v1540
        %1563 = vmatprep.subr.bf16.mxu0 0
        %1564 = vmatpush1.bf16.msra.mxu0 %v1539
        %1565 = vmatprep.subr.bf16.mxu0 0
        %1566 = vmatpush1.bf16.msra.mxu0 %v1538
        %1567 = vmatprep.subr.bf16.mxu0 0
        %1568 = vmatpush1.bf16.msra.mxu0 %v1537
        %1569 = vmatprep.subr.bf16.mxu0 0
        %1570 = vmatpush2.bf16.msra.mxu0 0
        %1571 = vmatprep.subr.bf16.mxu0 0
        %1572 = vmatpush2.bf16.msra.mxu0 0
        %1573 = vmatprep.subr.bf16.mxu0 0
        %1574 = vmatpush2.bf16.msra.mxu0 0
        %1575 = vmatprep.subr.bf16.mxu0 0
        %1576 = vmatpush2.bf16.msra.mxu0 0
        %1577 = vmatprep.subr.bf16.mxu0 0
        %1578 = vmatpush2.bf16.msra.mxu0 0
        %1579 = vmatprep.subr.bf16.mxu0 0
        %1580 = vmatpush2.bf16.msra.mxu0 0
        %1581 = vmatprep.subr.bf16.mxu0 0
        %1582 = vmatpush2.bf16.msra.mxu0 0
        %1583 = vmatprep.subr.bf16.mxu0 0
        %1584 = vmatpush2.bf16.msra.mxu0 0
        %1585 = vmatprep.mubr.bf16.mxu0 0
        %1586 = vmatmul.mubr.bf16.gmra.mxu0 %v1481
        %v1587 = vpop.f32.mrf.mxu0
        %v1588 = vadd.f32 %v1503, %v1587
        %v1589 = vpop.f32.mrf.mxu0
        %v1590 = vpop.f32.mrf.mxu0
        %v1591 = vpop.f32.mrf.mxu0
        %1592 = vdwg.mxu0
        %v1593 = vadd.f32 %v1588, %v750
        %v1594 = vld [vmem:[%s726] sm:$0x1]
        %v1595 = vld [vmem:[%s729] sm:$0x1]
        %1596 = vadd.xlane.f32.xlu0 %v1593
        %v1597 = vpop.xlane.xlu0 %1596
        %v1598 = vrcp.pop 128.0
        %v1599 = vmul.f32 %v1597, %v1598
        %v1600 = vsub.f32 %v1593, %v1599
        %v1601 = vmul.f32 %v1600, %v1600
        %1602 = vadd.xlane.f32.xlu0 %v1601
        %v1603 = vpop.xlane.xlu0 %1602
        %v1604 = vmul.f32 %v1603, %v1598
        %v1605 = vadd.f32 %v1604, 1e-12
        %v1606 = vrsqrt.pop %v1605
        %v1607 = vmul.f32 %v1600, %v1606
        %v1609 = vlaneseq
        %v1610 = vshrl.u32 %v1609, 7
        %v1611 = vsub.s32 0, %v1610
        %v1612 = vrot.slane %v1594, %v1611
        %v1614 = vmul.f32 %v1607, %v1612
        %v1616 = vlaneseq
        %v1617 = vshrl.u32 %v1616, 7
        %v1618 = vsub.s32 0, %v1617
        %v1619 = vrot.slane %v1595, %v1618
        %v1621 = vadd.f32 %v1614, %v1619
        %v1622 = vpack.c.bf16 %v1621, %v1621
        %v1623 = vld [vmem:[%s604] sm:$0xff]
        %v1624 = vld [vmem:[%s604 + $0x8] sm:$0xff]
        %v1625 = vld [vmem:[%s604 + $0x10] sm:$0xff]
        %v1626 = vld [vmem:[%s604 + $0x18] sm:$0xff]
        %v1627 = vld [vmem:[%s604 + $0x20] sm:$0xff]
        %v1628 = vld [vmem:[%s604 + $0x28] sm:$0xff]
        %v1629 = vld [vmem:[%s604 + $0x30] sm:$0xff]
        %v1630 = vld [vmem:[%s604 + $0x38] sm:$0xff]
        %v1631 = vld [vmem:[%s604 + $0x40] sm:$0xff]
        %v1632 = vld [vmem:[%s604 + $0x48] sm:$0xff]
        %v1633 = vld [vmem:[%s604 + $0x50] sm:$0xff]
        %v1634 = vld [vmem:[%s604 + $0x58] sm:$0xff]
        %v1635 = vld [vmem:[%s604 + $0x60] sm:$0xff]
        %v1636 = vld [vmem:[%s604 + $0x68] sm:$0xff]
        %v1637 = vld [vmem:[%s604 + $0x70] sm:$0xff]
        %v1638 = vld [vmem:[%s604 + $0x78] sm:$0xff]
        %v1639 = vld [vmem:[%s733] sm:$0x3]
        %v1641 = vlaneseq
        %v1642 = vshrl.u32 %v1641, 7
        %v1643 = vsub.s32 0, %v1642
        %v1644 = vrot.slane %v1639, %v1643
        %v1645 = vlaneseq
        %v1646 = vshrl.u32 %v1645, 7
        %v1647 = vsub.s32 1, %v1646
        %v1648 = vrot.slane %v1639, %v1647
        %v1667 = vunpack.c.l.b16 %v1623
        %v1668 = vunpack.c.h.b16 %v1623
        %v1669 = vunpack.c.l.b16 %v1624
        %v1670 = vunpack.c.h.b16 %v1624
        %v1671 = vunpack.c.l.b16 %v1625
        %v1672 = vunpack.c.h.b16 %v1625
        %v1673 = vunpack.c.l.b16 %v1626
        %v1674 = vunpack.c.h.b16 %v1626
        %v1675 = vunpack.c.l.b16 %v1627
        %v1676 = vunpack.c.h.b16 %v1627
        %v1677 = vunpack.c.l.b16 %v1628
        %v1678 = vunpack.c.h.b16 %v1628
        %v1679 = vunpack.c.l.b16 %v1629
        %v1680 = vunpack.c.h.b16 %v1629
        %v1681 = vunpack.c.l.b16 %v1630
        %v1682 = vunpack.c.h.b16 %v1630
        %v1683 = vunpack.c.l.b16 %v1631
        %v1684 = vunpack.c.h.b16 %v1631
        %v1685 = vunpack.c.l.b16 %v1632
        %v1686 = vunpack.c.h.b16 %v1632
        %v1687 = vunpack.c.l.b16 %v1633
        %v1688 = vunpack.c.h.b16 %v1633
        %v1689 = vunpack.c.l.b16 %v1634
        %v1690 = vunpack.c.h.b16 %v1634
        %v1691 = vunpack.c.l.b16 %v1635
        %v1692 = vunpack.c.h.b16 %v1635
        %v1693 = vunpack.c.l.b16 %v1636
        %v1694 = vunpack.c.h.b16 %v1636
        %v1695 = vunpack.c.l.b16 %v1637
        %v1696 = vunpack.c.h.b16 %v1637
        %v1697 = vunpack.c.l.b16 %v1638
        %v1698 = vunpack.c.h.b16 %v1638
        %v1699 = vpack.c.b16 %v1669, %v1667
        %v1700 = vpack.c.b16 %v1670, %v1668
        %v1701 = vpack.c.b16 %v1673, %v1671
        %v1702 = vpack.c.b16 %v1674, %v1672
        %v1703 = vpack.c.b16 %v1677, %v1675
        %v1704 = vpack.c.b16 %v1678, %v1676
        %v1705 = vpack.c.b16 %v1681, %v1679
        %v1706 = vpack.c.b16 %v1682, %v1680
        %v1707 = vpack.c.b16 %v1685, %v1683
        %v1708 = vpack.c.b16 %v1686, %v1684
        %v1709 = vpack.c.b16 %v1689, %v1687
        %v1710 = vpack.c.b16 %v1690, %v1688
        %v1711 = vpack.c.b16 %v1693, %v1691
        %v1712 = vpack.c.b16 %v1694, %v1692
        %v1713 = vpack.c.b16 %v1697, %v1695
        %v1714 = vpack.c.b16 %v1698, %v1696
        %1731 = vmatprep.subr.bf16.mxu0 %v1714
        %1732 = vmatpush1.bf16.msra.mxu0 %v1713
        %1733 = vmatprep.subr.bf16.mxu0 %v1712
        %1734 = vmatpush1.bf16.msra.mxu0 %v1711
        %1735 = vmatprep.subr.bf16.mxu0 %v1710
        %1736 = vmatpush1.bf16.msra.mxu0 %v1709
        %1737 = vmatprep.subr.bf16.mxu0 %v1708
        %1738 = vmatpush1.bf16.msra.mxu0 %v1707
        %1739 = vmatprep.subr.bf16.mxu0 %v1706
        %1740 = vmatpush1.bf16.msra.mxu0 %v1705
        %1741 = vmatprep.subr.bf16.mxu0 %v1704
        %1742 = vmatpush1.bf16.msra.mxu0 %v1703
        %1743 = vmatprep.subr.bf16.mxu0 %v1702
        %1744 = vmatpush1.bf16.msra.mxu0 %v1701
        %1745 = vmatprep.subr.bf16.mxu0 %v1700
        %1746 = vmatpush1.bf16.msra.mxu0 %v1699
        %1747 = vmatprep.subr.bf16.mxu0 0
        %1748 = vmatpush2.bf16.msra.mxu0 0
        %1749 = vmatprep.subr.bf16.mxu0 0
        %1750 = vmatpush2.bf16.msra.mxu0 0
        %1751 = vmatprep.subr.bf16.mxu0 0
        %1752 = vmatpush2.bf16.msra.mxu0 0
        %1753 = vmatprep.subr.bf16.mxu0 0
        %1754 = vmatpush2.bf16.msra.mxu0 0
        %1755 = vmatprep.subr.bf16.mxu0 0
        %1756 = vmatpush2.bf16.msra.mxu0 0
        %1757 = vmatprep.subr.bf16.mxu0 0
        %1758 = vmatpush2.bf16.msra.mxu0 0
        %1759 = vmatprep.subr.bf16.mxu0 0
        %1760 = vmatpush2.bf16.msra.mxu0 0
        %1761 = vmatprep.subr.bf16.mxu0 0
        %1762 = vmatpush2.bf16.msra.mxu0 0
        %1763 = vmatprep.mubr.bf16.mxu0 0
        %1764 = vmatmul.mubr.bf16.gmra.mxu0 %v1622
        %v1765 = vpop.f32.mrf.mxu0
        %v1766 = vadd.f32 %v1644, %v1765
        %v1767 = vpop.f32.mrf.mxu0
        %v1768 = vadd.f32 %v1648, %v1767
        %v1769 = vpop.f32.mrf.mxu0
        %v1770 = vpop.f32.mrf.mxu0
        %1771 = vdwg.mxu0
        %v1772 = vmul.f32 %v1766, %v1766
        %v1773 = vmul.f32 %v1768, %v1768
        %v1774 = vmul.f32 %v1766, %v1772
        %v1775 = vmul.f32 %v1768, %v1773
        %v1776 = vmul.f32 %v1774, 0.044715
        %v1777 = vmul.f32 %v1775, 0.044715
        %v1778 = vadd.f32 %v1766, %v1776
        %v1779 = vadd.f32 %v1768, %v1777
        %v1780 = vmul.f32 %v1778, 0.7978846
        %v1781 = vmul.f32 %v1779, 0.7978846
        %v1782 = vtanh.pop %v1780
        %v1783 = vtanh.pop %v1781
        %v1784 = vadd.f32 %v1782, 1.0
        %v1785 = vadd.f32 %v1783, 1.0
        %v1786 = vmul.f32 %v1784, 0.5
        %v1787 = vmul.f32 %v1785, 0.5
        %v1788 = vmul.f32 %v1766, %v1786
        %v1789 = vmul.f32 %v1768, %v1787
        %v1790 = vpack.c.bf16 %v1788, %v1788
        %v1791 = vpack.c.bf16 %v1789, %v1789
        %v1792 = vld [vmem:[%s613] sm:$0xf]
        %v1793 = vld [vmem:[%s613 + $0x4] sm:$0xf]
        %v1794 = vld [vmem:[%s613 + $0x8] sm:$0xf]
        %v1795 = vld [vmem:[%s613 + $0xc] sm:$0xf]
        %v1796 = vld [vmem:[%s613 + $0x10] sm:$0xf]
        %v1797 = vld [vmem:[%s613 + $0x14] sm:$0xf]
        %v1798 = vld [vmem:[%s613 + $0x18] sm:$0xf]
        %v1799 = vld [vmem:[%s613 + $0x1c] sm:$0xf]
        %v1800 = vld [vmem:[%s613 + $0x20] sm:$0xf]
        %v1801 = vld [vmem:[%s613 + $0x24] sm:$0xf]
        %v1802 = vld [vmem:[%s613 + $0x28] sm:$0xf]
        %v1803 = vld [vmem:[%s613 + $0x2c] sm:$0xf]
        %v1804 = vld [vmem:[%s613 + $0x30] sm:$0xf]
        %v1805 = vld [vmem:[%s613 + $0x34] sm:$0xf]
        %v1806 = vld [vmem:[%s613 + $0x38] sm:$0xf]
        %v1807 = vld [vmem:[%s613 + $0x3c] sm:$0xf]
        %v1808 = vld [vmem:[%s613 + $0x40] sm:$0xf]
        %v1809 = vld [vmem:[%s613 + $0x44] sm:$0xf]
        %v1810 = vld [vmem:[%s613 + $0x48] sm:$0xf]
        %v1811 = vld [vmem:[%s613 + $0x4c] sm:$0xf]
        %v1812 = vld [vmem:[%s613 + $0x50] sm:$0xf]
        %v1813 = vld [vmem:[%s613 + $0x54] sm:$0xf]
        %v1814 = vld [vmem:[%s613 + $0x58] sm:$0xf]
        %v1815 = vld [vmem:[%s613 + $0x5c] sm:$0xf]
        %v1816 = vld [vmem:[%s613 + $0x60] sm:$0xf]
        %v1817 = vld [vmem:[%s613 + $0x64] sm:$0xf]
        %v1818 = vld [vmem:[%s613 + $0x68] sm:$0xf]
        %v1819 = vld [vmem:[%s613 + $0x6c] sm:$0xf]
        %v1820 = vld [vmem:[%s613 + $0x70] sm:$0xf]
        %v1821 = vld [vmem:[%s613 + $0x74] sm:$0xf]
        %v1822 = vld [vmem:[%s613 + $0x78] sm:$0xf]
        %v1823 = vld [vmem:[%s613 + $0x7c] sm:$0xf]
        %v1824 = vld [vmem:[%s736] sm:$0x1]
        %v1826 = vlaneseq
        %v1827 = vshrl.u32 %v1826, 7
        %v1828 = vsub.s32 0, %v1827
        %v1829 = vrot.slane %v1824, %v1828
        %v1863 = vunpack.c.l.b16 %v1792
        %v1864 = vunpack.c.l.b16 %v1793
        %v1865 = vunpack.c.l.b16 %v1794
        %v1866 = vunpack.c.l.b16 %v1795
        %v1867 = vunpack.c.l.b16 %v1796
        %v1868 = vunpack.c.l.b16 %v1797
        %v1869 = vunpack.c.l.b16 %v1798
        %v1870 = vunpack.c.l.b16 %v1799
        %v1871 = vunpack.c.l.b16 %v1800
        %v1872 = vunpack.c.l.b16 %v1801
        %v1873 = vunpack.c.l.b16 %v1802
        %v1874 = vunpack.c.l.b16 %v1803
        %v1875 = vunpack.c.l.b16 %v1804
        %v1876 = vunpack.c.l.b16 %v1805
        %v1877 = vunpack.c.l.b16 %v1806
        %v1878 = vunpack.c.l.b16 %v1807
        %v1879 = vunpack.c.l.b16 %v1808
        %v1880 = vunpack.c.l.b16 %v1809
        %v1881 = vunpack.c.l.b16 %v1810
        %v1882 = vunpack.c.l.b16 %v1811
        %v1883 = vunpack.c.l.b16 %v1812
        %v1884 = vunpack.c.l.b16 %v1813
        %v1885 = vunpack.c.l.b16 %v1814
        %v1886 = vunpack.c.l.b16 %v1815
        %v1887 = vunpack.c.l.b16 %v1816
        %v1888 = vunpack.c.l.b16 %v1817
        %v1889 = vunpack.c.l.b16 %v1818
        %v1890 = vunpack.c.l.b16 %v1819
        %v1891 = vunpack.c.l.b16 %v1820
        %v1892 = vunpack.c.l.b16 %v1821
        %v1893 = vunpack.c.l.b16 %v1822
        %v1894 = vunpack.c.l.b16 %v1823
        %v1895 = vpack.c.b16 %v1864, %v1863
        %v1896 = vpack.c.b16 %v1866, %v1865
        %v1897 = vpack.c.b16 %v1868, %v1867
        %v1898 = vpack.c.b16 %v1870, %v1869
        %v1899 = vpack.c.b16 %v1872, %v1871
        %v1900 = vpack.c.b16 %v1874, %v1873
        %v1901 = vpack.c.b16 %v1876, %v1875
        %v1902 = vpack.c.b16 %v1878, %v1877
        %v1903 = vpack.c.b16 %v1880, %v1879
        %v1904 = vpack.c.b16 %v1882, %v1881
        %v1905 = vpack.c.b16 %v1884, %v1883
        %v1906 = vpack.c.b16 %v1886, %v1885
        %v1907 = vpack.c.b16 %v1888, %v1887
        %v1908 = vpack.c.b16 %v1890, %v1889
        %v1909 = vpack.c.b16 %v1892, %v1891
        %v1910 = vpack.c.b16 %v1894, %v1893
        %1927 = vmatprep.subr.bf16.mxu0 0
        %1928 = vmatpush1.bf16.msra.mxu0 %v1902
        %1929 = vmatprep.subr.bf16.mxu0 0
        %1930 = vmatpush1.bf16.msra.mxu0 %v1901
        %1931 = vmatprep.subr.bf16.mxu0 0
        %1932 = vmatpush1.bf16.msra.mxu0 %v1900
        %1933 = vmatprep.subr.bf16.mxu0 0
        %1934 = vmatpush1.bf16.msra.mxu0 %v1899
        %1935 = vmatprep.subr.bf16.mxu0 0
        %1936 = vmatpush1.bf16.msra.mxu0 %v1898
        %1937 = vmatprep.subr.bf16.mxu0 0
        %1938 = vmatpush1.bf16.msra.mxu0 %v1897
        %1939 = vmatprep.subr.bf16.mxu0 0
        %1940 = vmatpush1.bf16.msra.mxu0 %v1896
        %1941 = vmatprep.subr.bf16.mxu0 0
        %1942 = vmatpush1.bf16.msra.mxu0 %v1895
        %1943 = vmatprep.subr.bf16.mxu0 0
        %1944 = vmatpush2.bf16.msra.mxu0 %v1910
        %1945 = vmatprep.subr.bf16.mxu0 0
        %1946 = vmatpush2.bf16.msra.mxu0 %v1909
        %1947 = vmatprep.subr.bf16.mxu0 0
        %1948 = vmatpush2.bf16.msra.mxu0 %v1908
        %1949 = vmatprep.subr.bf16.mxu0 0
        %1950 = vmatpush2.bf16.msra.mxu0 %v1907
        %1951 = vmatprep.subr.bf16.mxu0 0
        %1952 = vmatpush2.bf16.msra.mxu0 %v1906
        %1953 = vmatprep.subr.bf16.mxu0 0
        %1954 = vmatpush2.bf16.msra.mxu0 %v1905
        %1955 = vmatprep.subr.bf16.mxu0 0
        %1956 = vmatpush2.bf16.msra.mxu0 %v1904
        %1957 = vmatprep.subr.bf16.mxu0 0
        %1958 = vmatpush2.bf16.msra.mxu0 %v1903
        %1959 = vmatprep.mubr.bf16.mxu0 %v1791
        %1960 = vmatmul.mubr.bf16.gmra.mxu0 %v1790
        %v1961 = vpop.f32.mrf.mxu0
        %v1962 = vadd.f32 %v1829, %v1961
        %v1963 = vpop.f32.mrf.mxu0
        %v1964 = vpop.f32.mrf.mxu0
        %v1965 = vpop.f32.mrf.mxu0
        %1966 = vdwg.mxu0
        %v1967 = vadd.f32 %v1962, %v1621
        %v1968 = vld [vmem:[%s739] sm:$0x1]
        %v1969 = vld [vmem:[%s742] sm:$0x1]
        %1970 = vadd.xlane.f32.xlu0 %v1967
        %v1971 = vpop.xlane.xlu0 %1970
        %v1972 = vmul.f32 %v1971, %v1598
        %v1973 = vsub.f32 %v1967, %v1972
        %v1974 = vmul.f32 %v1973, %v1973
        %1975 = vadd.xlane.f32.xlu0 %v1974
        %v1976 = vpop.xlane.xlu0 %1975
        %v1977 = vmul.f32 %v1976, %v1598
        %v1978 = vadd.f32 %v1977, 1e-12
        %v1979 = vrsqrt.pop %v1978
        %v1980 = vmul.f32 %v1973, %v1979
        %v1982 = vlaneseq
        %v1983 = vshrl.u32 %v1982, 7
        %v1984 = vsub.s32 0, %v1983
        %v1985 = vrot.slane %v1968, %v1984
        %v1987 = vmul.f32 %v1980, %v1985
        %v1989 = vlaneseq
        %v1990 = vshrl.u32 %v1989, 7
        %v1991 = vsub.s32 0, %v1990
        %v1992 = vrot.slane %v1969, %v1991
        %v1994 = vadd.f32 %v1987, %v1992
        %1995 = vst [vmem:[#allocation2] sm:$0xff] %v1994
        %p1996 = scmp.eq.s32.totalorder %s39, 1
        // Predicated region
        $region93: #{xlnet_encoder_forward.1} parent=75 // pred_check
          %p1997 = pneg %p1996
        $region94: #{xlnet_encoder_forward.1} parent=75 // pred_check_branch
          %1999 = sbr.rel (%p1997) target = $region96
        $region95: #{xlnet_encoder_forward.1} parent=75 // pred_region
          %2000 = vst [vmem:[%s704] sm:$0x1] %v1994
        $region96: #{xlnet_encoder_forward.1} parent=75 // pred_fallthru
          _
        %s2001 = sand.u32 %s418, 1
        %s2002 = scalar_lea.sflag [#allocation6], %s2001
        %s2003 = sand.u32 %s418, 1
        %s2004 = scalar_lea.vmem [#allocation10], %s2003
        // Predicated region
        $region97: #{xlnet_encoder_forward.1} parent=75 // pred_check
          %p2005 = pneg %p428
        $region98: #{xlnet_encoder_forward.1} parent=75 // pred_check_branch
          %2007 = sbr.rel (%p2005) target = $region100
        $region99: #{xlnet_encoder_forward.1} parent=75 // pred_region
          %s2009 = ssub.s32 16, 16
          %2010 = vsyncadd %s2002, %s2009
          %s2011 = smul.addr %s38, 16
          %s2012 = scalar_lea.hbm %s14, %s2011
          %s2014 = sshll.u32 %s2004, 4
          %s2015 = int_to_ptr.vmem [resolvable:$true] %s2014
          %2017 = dma.vmem_to_hbm [thread:$0]  %s2015, 16, %s2012, %s2002
        $region100: #{xlnet_encoder_forward.1} parent=75 // pred_fallthru
          _
      $region76: #{xlnet_encoder_forward.1} parent=5 // pred_fallthru
        _
      %p2018 = scmp.le.s32.totalorder 2, %s29
      // Predicated region
      $region101: #{xlnet_encoder_forward.1} parent=5 // pred_check
        %p2019 = pneg %p2018
      $region102: #{xlnet_encoder_forward.1} parent=5 // pred_check_branch
        %2021 = sbr.rel (%p2019) target = $region104
      $region103: #{xlnet_encoder_forward.1} parent=5 // pred_region
        %s2022 = ssub.s32 %s29, 2
        // Predicated region
        $region105: #{xlnet_encoder_forward.1} parent=103 // pred_check
          %p2023 = pneg %p434
        $region106: #{xlnet_encoder_forward.1} parent=103 // pred_check_branch
          %2025 = sbr.rel (%p2023) target = $region108
        $region107: #{xlnet_encoder_forward.1} parent=103 // pred_region
          %s2026 = sand.u32 %s419, 1
          %s2027 = scalar_lea.sflag [#allocation6], %s2026
          %s2028 = sand.u32 %s419, 1
          %s2029 = scalar_lea.vmem [#allocation10], %s2028
          %2030 = dma.done %s2027, 16
        $region108: #{xlnet_encoder_forward.1} parent=103 // pred_fallthru
          _
      $region104: #{xlnet_encoder_forward.1} parent=5 // pred_fallthru
        _
    $region6: #{xlnet_encoder_forward.1} parent=1 // loop_footer
      %s33 = sadd.s32 1, %s29
    $region7: #{xlnet_encoder_forward.1} parent=1 // loop_footer_branch
      %28 = sbr.rel target = $region3
    $region8: #{xlnet_encoder_forward.1} parent=1 // loop_exit
      _
    %2031 = vsyncpa [#allocation5], 1
    %s2032 = scalar_lea.sflag [#allocation5], 1
    %2033 = vsyncpa %s2032, 1
    %2034 = vsyncpa [#allocation8], 1
    %s2035 = scalar_lea.sflag [#allocation8], 1
    %2036 = vsyncpa %s2035, 1
    %2037 = vsyncpa [#allocation6], 1
    %s2038 = scalar_lea.sflag [#allocation6], 1
    %2039 = vsyncpa %s2038, 1

</llo_original>
